<compile_context>
chip_gen: v7x
topology: tpu7x:2x2x1
jax: 0.10.0
libtpu: 0.0.40
codegen_flags: <defaults>
</compile_context>

<pallas_src>
import functools

import jax
import jax.numpy as jnp
from jax import lax
from jax.experimental import pallas as pl
from jax.experimental.pallas import tpu as pltpu


def _round_up(x, m):
    return (x + m - 1) // m * m


def basic_convolution_block(x_ncdhw, params, *, ks=3, tm=2048):
    """x_ncdhw: [N, inc, D, H, W] float32. Returns [N, outc, D, H, W] float32."""
    assert ks == 3, "only ks=3 / stride=1 / dilation=1 implemented"
    w = params["conv_weight"]          # [27, inc, outc]  (torchsparse layout)
    gamma = params["bn_gamma"]         # [outc]
    beta = params["bn_beta"]           # [outc]
    rmean = params["bn_running_mean"]  # [outc]
    rvar = params["bn_running_var"]    # [outc]
    eps = params["bn_eps"]

    N, inc, D, H, W = x_ncdhw.shape
    k3, inc_w, outc = w.shape
    assert k3 == ks ** 3 and inc_w == inc

    Dp, Hp, Wp = D + 2, H + 2, W + 2
    pf = Dp * Hp * Wp                      # flat positions per batch (padded grid)
    halo = Hp * Wp + Wp + 1                # max |flat offset| of a 3x3x3 tap
    hp = _round_up(halo, 128)              # 128-lane-aligned halo width

    # Tile width along the flat voxel axis: multiple of 2*hp, no larger than
    # needed, and with enough grid steps to keep both v7x TensorCores busy.
    tm = max(2 * hp, min(_round_up(tm, 2 * hp), _round_up(pf, 2 * hp)))
    if N * pl.cdiv(pf, tm) < 2:
        tm = max(2 * hp, _round_up(pl.cdiv(pf, 2), 2 * hp))
    assert tm % (2 * hp) == 0 and hp >= halo

    nt = pl.cdiv(pf, tm)
    p_out = nt * tm
    hb = tm // (2 * hp)                    # halo-block stride (in 2*hp blocks)

    # Fold BatchNorm (inference mode) into the conv weight / bias; weight is
    # laid out (outc, 27*inc), tap-major / channel-inner, to match the stacked
    # (27*inc, TM) activation operand built inside the kernel.
    scale = gamma / jnp.sqrt(rvar + eps)                              # [outc] f32
    w_eff = jnp.transpose(w * scale[None, None, :], (2, 0, 1))        # [outc, 27, inc]
    w_eff = w_eff.reshape(outc, k3 * inc).astype(jnp.bfloat16)
    b_eff = (beta - rmean * scale).reshape(outc, 1).astype(jnp.float32)

    # Channels-first: spatial "same" pad, flatten (d,h,w), then pad the flat
    # axis by hp on the left and (tile tail + hp) on the right (halo zeros).
    xb = x_ncdhw.astype(jnp.bfloat16)
    xp = jnp.pad(xb, ((0, 0), (0, 0), (1, 1), (1, 1), (1, 1)))
    xf = xp.reshape(N, inc, pf)
    xf = jnp.pad(xf, ((0, 0), (0, 0), (hp, (p_out - pf) + hp)))       # [N, inc, p_out + 2*hp]

    # Flat offsets of the 27 taps; (kd, kh, kw) row-major, matching conv_weight.
    offsets = tuple((kd - 1) * Hp * Wp + (kh - 1) * Wp + (kw - 1)
                    for kd in range(3) for kh in range(3) for kw in range(3))

    def kernel(x_ref, halo_ref, w_ref, b_ref, o_ref):
        # x_ref covers padded cols [i*tm, (i+1)*tm) = flat [i*tm - hp, (i+1)*tm - hp);
        # halo_ref covers the next 2*hp cols, so window = flat [i*tm - hp, (i+1)*tm + hp).
        window = jnp.concatenate([x_ref[...], halo_ref[...]], axis=-1)   # (inc, tm+2*hp) bf16
        # im2col in VMEM only: rows = k*inc + c (tap-major, channel-inner).
        stacked = jnp.concatenate(
            [window[:, hp + off:hp + off + tm] for off in offsets], axis=0)  # (27*inc, tm)
        acc = jnp.dot(w_ref[...], stacked,
                      preferred_element_type=jnp.float32)                # one MXU matmul, K=27*inc
        o_ref[...] = jnp.maximum(acc + b_ref[...], 0.0).astype(o_ref.dtype)

    # VMEM footprint estimate (double-buffered ins/outs + window + stacked + acc).
    vmem_bytes = (2 * inc * tm * 2 + 2 * inc * 2 * hp * 2
                  + 2 * outc * tm * 4
                  + inc * (tm + 2 * hp) * 2
                  + k3 * inc * tm * 2
                  + outc * tm * 4
                  + 2 * (outc * k3 * inc) * 2 + 2 * outc * 4)
    vmem_limit = int(min(64 * 1024 * 1024, max(32 * 1024 * 1024, 2 * vmem_bytes)))

    cost = pl.CostEstimate(
        flops=2 * N * p_out * outc * k3 * inc,
        transcendentals=0,
        bytes_accessed=int(N * inc * (p_out + 2 * hp) * 2
                           + N * outc * p_out * 4
                           + outc * k3 * inc * 2 + outc * 4))

    out_flat = pl.pallas_call(
        kernel,
        out_shape=jax.ShapeDtypeStruct((N, outc, p_out), jnp.float32),
        grid_spec=pltpu.PrefetchScalarGridSpec(
            num_scalar_prefetch=0,
            grid=(N, nt),
            in_specs=[
                # main tile (includes the left halo because of the hp left pad)
                pl.BlockSpec((None, inc, tm), lambda n, i: (n, 0, i)),
                # small 128-aligned right-halo block (2*hp columns)
                pl.BlockSpec((None, inc, 2 * hp), lambda n, i: (n, 0, (i + 1) * hb)),
                pl.BlockSpec((outc, k3 * inc), lambda n, i: (0, 0)),
                pl.BlockSpec((outc, 1), lambda n, i: (0, 0)),
            ],
            out_specs=pl.BlockSpec((None, outc, tm), lambda n, i: (n, 0, i)),
        ),
        compiler_params=pltpu.CompilerParams(
            dimension_semantics=("parallel", "parallel"),
            vmem_limit_bytes=vmem_limit),
        cost_estimate=cost,
    )(xf, xf, w_eff, b_eff)

    # Drop the flat tail, un-flatten, drop the "same"-padding ring -> NCDHW.
    out = out_flat[:, :, :pf].reshape(N, outc, Dp, Hp, Wp)
    return out[:, :, 1:1 + D, 1:1 + H, 1:1 + W]


def init_params(key, inc, outc, ks=3):
    k1, k2, k3 = jax.random.split(key, 3)
    fan = ks ** 3 * inc
    conv_weight = (jax.random.normal(k1, (ks ** 3, inc, outc), jnp.float32)
                   / jnp.sqrt(fan))
    gamma = 1.0 + 0.1 * jax.random.normal(k2, (outc,), jnp.float32)
    beta = 0.1 * jax.random.normal(k3, (outc,), jnp.float32)
    return {
        "conv_weight": conv_weight,
        "bn_gamma": gamma,
        "bn_beta": beta,
        "bn_running_mean": jnp.zeros((outc,), jnp.float32),
        "bn_running_var": jnp.ones((outc,), jnp.float32),
        "bn_eps": 1e-5,
    }


if __name__ == "__main__":
    key = jax.random.PRNGKey(0)
    kx, kp = jax.random.split(key)

    N, inc, outc = 2, 4, 8
    D = H = W = 8  # 1024 voxels

    x = jax.random.normal(kx, (N, inc, D, H, W), jnp.float32)
    params = init_params(kp, inc, outc, ks=3)

    fn = jax.jit(functools.partial(basic_convolution_block, ks=3, tm=2048))
    out = jax.block_until_ready(fn(x, params))

    assert out.shape == (N, outc, D, H, W), out.shape
    assert bool(jnp.all(out >= 0.0))

    # --- Tight check: identical bf16-rounded operands, exact f32 elementwise math.
    scale = params["bn_gamma"] / jnp.sqrt(params["bn_running_var"] + params["bn_eps"])
    bias = params["bn_beta"] - params["bn_running_mean"] * scale
    w_fold = jnp.transpose(params["conv_weight"] * scale[None, None, :], (0, 2, 1))
    w_fold = w_fold.astype(jnp.bfloat16).astype(jnp.float32)          # [27, outc, inc]
    xb = x.astype(jnp.bfloat16).astype(jnp.float32)
    xpad = jnp.pad(xb, ((0, 0), (0, 0), (1, 1), (1, 1), (1, 1)))
    ref = jnp.zeros((N, outc, D, H, W), jnp.float32)
    k = 0
    for kd in range(3):
        for kh in range(3):
            for kw in range(3):
                xs = xpad[:, :, kd:kd + D, kh:kh + H, kw:kw + W]      # [N, inc, D, H, W]
                ref = ref + jnp.sum(
                    w_fold[k][None, :, :, None, None, None] * xs[:, None], axis=2)
                k += 1
    ref = jnp.maximum(ref + bias[None, :, None, None, None], 0.0)
    err = float(jnp.max(jnp.abs(out - ref)))
    assert jnp.allclose(out, ref, atol=1e-4, rtol=1e-4), err

    # --- Loose check vs full-f32 dense conv3d + BN(eval) + ReLU (bf16 tolerance).
    wr = params["conv_weight"].reshape(3, 3, 3, inc, outc)
    ref2 = lax.conv_general_dilated(
        x, wr, window_strides=(1, 1, 1), padding="SAME",
        dimension_numbers=("NCDHW", "DHWIO", "NCDHW"),
        precision=lax.Precision.HIGHEST)
    ref2 = jnp.maximum(ref2 * scale[None, :, None, None, None]
                       + bias[None, :, None, None, None], 0.0)
    assert jnp.allclose(out, ref2, atol=5e-2, rtol=5e-2)

    print("KERNEL_OK")
</pallas_src>

<mosaic_0001>
module attributes {stable_mosaic.version = 11 : i64} {
  func.func @kernel(%arg0: i32, %arg1: i32, %arg2: memref<1x4x1024xbf16, #tpu.memory_space<vmem>>, %arg3: memref<1x4x256xbf16, #tpu.memory_space<vmem>>, %arg4: memref<8x108xbf16, #tpu.memory_space<vmem>>, %arg5: memref<8x1xf32, #tpu.memory_space<vmem>>, %arg6: memref<1x8x1024xf32, #tpu.memory_space<vmem>>) attributes {dimension_semantics = [#tpu.dimension_semantics<parallel>, #tpu.dimension_semantics<parallel>], iteration_bounds = array<i64: 2, 1>, scalar_prefetch = 0 : i64, scratch_operands = 0 : i64, tpu.core_type = #tpu.core_type<tc>, window_params = [{transform_indices = @transform_0, window_bounds = array<i64: 1, 4, 1024>}, {transform_indices = @transform_1, window_bounds = array<i64: 1, 4, 256>}, {pipeline_mode = #tpu.pipeline_mode<synchronous>, transform_indices = @transform_2, window_bounds = array<i64: 8, 108>}, {pipeline_mode = #tpu.pipeline_mode<synchronous>, transform_indices = @transform_3, window_bounds = array<i64: 8, 1>}, {transform_indices = @transform_4, window_bounds = array<i64: 1, 8, 1024>}]} {
    %c0 = arith.constant 0 : index
    %c0_0 = arith.constant 0 : index
    %c0_1 = arith.constant 0 : index
    %0 = vector.load %arg2[%c0, %c0_0, %c0_1] : memref<1x4x1024xbf16, #tpu.memory_space<vmem>>, vector<1x4x1024xbf16>
    %1 = vector.shape_cast %0 : vector<1x4x1024xbf16> to vector<4x1024xbf16>
    %c0_2 = arith.constant 0 : index
    %c0_3 = arith.constant 0 : index
    %c0_4 = arith.constant 0 : index
    %2 = vector.load %arg3[%c0_2, %c0_3, %c0_4] : memref<1x4x256xbf16, #tpu.memory_space<vmem>>, vector<1x4x256xbf16>
    %3 = vector.shape_cast %2 : vector<1x4x256xbf16> to vector<4x256xbf16>
    %4 = tpu.concatenate %1, %3 in 1 : vector<4x1024xbf16>, vector<4x256xbf16> -> vector<4x1280xbf16>
    %5 = vector.extract_strided_slice %4 {offsets = [0, 17], sizes = [4, 1024], strides = [1, 1]} : vector<4x1280xbf16> to vector<4x1024xbf16>
    %6 = vector.extract_strided_slice %4 {offsets = [0, 18], sizes = [4, 1024], strides = [1, 1]} : vector<4x1280xbf16> to vector<4x1024xbf16>
    %7 = vector.extract_strided_slice %4 {offsets = [0, 19], sizes = [4, 1024], strides = [1, 1]} : vector<4x1280xbf16> to vector<4x1024xbf16>
    %8 = vector.extract_strided_slice %4 {offsets = [0, 27], sizes = [4, 1024], strides = [1, 1]} : vector<4x1280xbf16> to vector<4x1024xbf16>
    %9 = vector.extract_strided_slice %4 {offsets = [0, 28], sizes = [4, 1024], strides = [1, 1]} : vector<4x1280xbf16> to vector<4x1024xbf16>
    %10 = vector.extract_strided_slice %4 {offsets = [0, 29], sizes = [4, 1024], strides = [1, 1]} : vector<4x1280xbf16> to vector<4x1024xbf16>
    %11 = vector.extract_strided_slice %4 {offsets = [0, 37], sizes = [4, 1024], strides = [1, 1]} : vector<4x1280xbf16> to vector<4x1024xbf16>
    %12 = vector.extract_strided_slice %4 {offsets = [0, 38], sizes = [4, 1024], strides = [1, 1]} : vector<4x1280xbf16> to vector<4x1024xbf16>
    %13 = vector.extract_strided_slice %4 {offsets = [0, 39], sizes = [4, 1024], strides = [1, 1]} : vector<4x1280xbf16> to vector<4x1024xbf16>
    %14 = vector.extract_strided_slice %4 {offsets = [0, 117], sizes = [4, 1024], strides = [1, 1]} : vector<4x1280xbf16> to vector<4x1024xbf16>
    %15 = vector.extract_strided_slice %4 {offsets = [0, 118], sizes = [4, 1024], strides = [1, 1]} : vector<4x1280xbf16> to vector<4x1024xbf16>
    %16 = vector.extract_strided_slice %4 {offsets = [0, 119], sizes = [4, 1024], strides = [1, 1]} : vector<4x1280xbf16> to vector<4x1024xbf16>
    %17 = vector.extract_strided_slice %4 {offsets = [0, 127], sizes = [4, 1024], strides = [1, 1]} : vector<4x1280xbf16> to vector<4x1024xbf16>
    %18 = vector.extract_strided_slice %4 {offsets = [0, 128], sizes = [4, 1024], strides = [1, 1]} : vector<4x1280xbf16> to vector<4x1024xbf16>
    %19 = vector.extract_strided_slice %4 {offsets = [0, 129], sizes = [4, 1024], strides = [1, 1]} : vector<4x1280xbf16> to vector<4x1024xbf16>
    %20 = vector.extract_strided_slice %4 {offsets = [0, 137], sizes = [4, 1024], strides = [1, 1]} : vector<4x1280xbf16> to vector<4x1024xbf16>
    %21 = vector.extract_strided_slice %4 {offsets = [0, 138], sizes = [4, 1024], strides = [1, 1]} : vector<4x1280xbf16> to vector<4x1024xbf16>
    %22 = vector.extract_strided_slice %4 {offsets = [0, 139], sizes = [4, 1024], strides = [1, 1]} : vector<4x1280xbf16> to vector<4x1024xbf16>
    %23 = vector.extract_strided_slice %4 {offsets = [0, 217], sizes = [4, 1024], strides = [1, 1]} : vector<4x1280xbf16> to vector<4x1024xbf16>
    %24 = vector.extract_strided_slice %4 {offsets = [0, 218], sizes = [4, 1024], strides = [1, 1]} : vector<4x1280xbf16> to vector<4x1024xbf16>
    %25 = vector.extract_strided_slice %4 {offsets = [0, 219], sizes = [4, 1024], strides = [1, 1]} : vector<4x1280xbf16> to vector<4x1024xbf16>
    %26 = vector.extract_strided_slice %4 {offsets = [0, 227], sizes = [4, 1024], strides = [1, 1]} : vector<4x1280xbf16> to vector<4x1024xbf16>
    %27 = vector.extract_strided_slice %4 {offsets = [0, 228], sizes = [4, 1024], strides = [1, 1]} : vector<4x1280xbf16> to vector<4x1024xbf16>
    %28 = vector.extract_strided_slice %4 {offsets = [0, 229], sizes = [4, 1024], strides = [1, 1]} : vector<4x1280xbf16> to vector<4x1024xbf16>
    %29 = vector.extract_strided_slice %4 {offsets = [0, 237], sizes = [4, 1024], strides = [1, 1]} : vector<4x1280xbf16> to vector<4x1024xbf16>
    %30 = vector.extract_strided_slice %4 {offsets = [0, 238], sizes = [4, 1024], strides = [1, 1]} : vector<4x1280xbf16> to vector<4x1024xbf16>
    %31 = vector.extract_strided_slice %4 {offsets = [0, 239], sizes = [4, 1024], strides = [1, 1]} : vector<4x1280xbf16> to vector<4x1024xbf16>
    %32 = tpu.concatenate %5, %6, %7, %8, %9, %10, %11, %12, %13, %14, %15, %16, %17, %18, %19, %20 in 0 : vector<4x1024xbf16>, vector<4x1024xbf16>, vector<4x1024xbf16>, vector<4x1024xbf16>, vector<4x1024xbf16>, vector<4x1024xbf16>, vector<4x1024xbf16>, vector<4x1024xbf16>, vector<4x1024xbf16>, vector<4x1024xbf16>, vector<4x1024xbf16>, vector<4x1024xbf16>, vector<4x1024xbf16>, vector<4x1024xbf16>, vector<4x1024xbf16>, vector<4x1024xbf16> -> vector<64x1024xbf16>
    %33 = tpu.concatenate %21, %22, %23, %24, %25, %26, %27, %28, %29, %30, %31 in 0 : vector<4x1024xbf16>, vector<4x1024xbf16>, vector<4x1024xbf16>, vector<4x1024xbf16>, vector<4x1024xbf16>, vector<4x1024xbf16>, vector<4x1024xbf16>, vector<4x1024xbf16>, vector<4x1024xbf16>, vector<4x1024xbf16>, vector<4x1024xbf16> -> vector<44x1024xbf16>
    %34 = tpu.concatenate %32, %33 in 0 : vector<64x1024xbf16>, vector<44x1024xbf16> -> vector<108x1024xbf16>
    %c0_5 = arith.constant 0 : index
    %c0_6 = arith.constant 0 : index
    %35 = vector.load %arg4[%c0_5, %c0_6] : memref<8x108xbf16, #tpu.memory_space<vmem>>, vector<8x108xbf16>
    %cst = arith.constant dense<0.000000e+00> : vector<8x1024xf32>
    %36 = tpu.matmul %35, %34, %cst {dimension_numbers = #tpu.dot_dimension_numbers<[1], [0], [0], [1], [0, 0, 1, 1], [], []>} : vector<8x108xbf16>, vector<108x1024xbf16>, vector<8x1024xf32> -> vector<8x1024xf32>
    %c0_7 = arith.constant 0 : index
    %c0_8 = arith.constant 0 : index
    %37 = vector.load %arg5[%c0_7, %c0_8] : memref<8x1xf32, #tpu.memory_space<vmem>>, vector<8x1xf32>
    %38 = vector.broadcast %37 : vector<8x1xf32> to vector<8x1024xf32>
    %39 = arith.addf %36, %38 : vector<8x1024xf32>
    %cst_9 = arith.constant 0.000000e+00 : f32
    %40 = vector.broadcast %cst_9 : f32 to vector<8x1024xf32>
    %41 = arith.maximumf %39, %40 : vector<8x1024xf32>
    %c0_10 = arith.constant 0 : index
    %c0_11 = arith.constant 0 : index
    %c0_12 = arith.constant 0 : index
    %42 = vector.load %arg6[%c0_10, %c0_11, %c0_12] : memref<1x8x1024xf32, #tpu.memory_space<vmem>>, vector<1x8x1024xf32>
    %43 = vector.shape_cast %42 : vector<1x8x1024xf32> to vector<8x1024xf32>
    %44 = vector.shape_cast %41 : vector<8x1024xf32> to vector<1x8x1024xf32>
    tpu.vector_store %arg6[%c0_10, %c0_11, %c0_12], %44 {strides = array<i32>} : memref<1x8x1024xf32, #tpu.memory_space<vmem>>, vector<1x8x1024xf32>,
    return
  }
  func.func @transform_0(%arg0: i32, %arg1: i32) -> (i32, i32, i32) {
    %c0_i32 = arith.constant 0 : i32
    %c0_i32_0 = arith.constant 0 : i32
    return %arg0, %c0_i32, %arg1 : i32, i32, i32
  }
  func.func @transform_1(%arg0: i32, %arg1: i32) -> (i32, i32, i32) {
    %c1_i32 = arith.constant 1 : i32
    %0 = arith.addi %arg1, %c1_i32 : i32
    %c4_i32 = arith.constant 4 : i32
    %1 = arith.muli %0, %c4_i32 : i32
    %c0_i32 = arith.constant 0 : i32
    %c0_i32_0 = arith.constant 0 : i32
    return %arg0, %c0_i32, %1 : i32, i32, i32
  }
  func.func @transform_2(%arg0: i32, %arg1: i32) -> (i32, i32) {
    %c0_i32 = arith.constant 0 : i32
    %c0_i32_0 = arith.constant 0 : i32
    %c0_i32_1 = arith.constant 0 : i32
    return %c0_i32, %c0_i32_0 : i32, i32
  }
  func.func @transform_3(%arg0: i32, %arg1: i32) -> (i32, i32) {
    %c0_i32 = arith.constant 0 : i32
    %c0_i32_0 = arith.constant 0 : i32
    %c0_i32_1 = arith.constant 0 : i32
    return %c0_i32, %c0_i32_0 : i32, i32
  }
  func.func @transform_4(%arg0: i32, %arg1: i32) -> (i32, i32, i32) {
    %c0_i32 = arith.constant 0 : i32
    %c0_i32_0 = arith.constant 0 : i32
    return %arg0, %c0_i32, %arg1 : i32, i32, i32
  }
}

</mosaic_0001>

<llo_original>
// kernel: basic_convolution_block.1
$region0: #{basic_convolution_block.1}
  #allocation0 [shape = 'u32[]', space=smem, size = 0x4, offset = 0x4, fixed_abs, tag = 'smem constant byte address 0x4 - core index']
  #allocation1 [shape = 'u32[144,128]{1,0:T(1,128)}', space=vmem, size = 0x12000, scoped, tag = 'internal scratch']
  %s0 = inlined_call_operand.vmem [shape: bf16[2,4,1280], index: 0, kind: input, shape index: {}, may-alias: {0,1}]
  %s1 = inlined_call_operand.vmem [shape: bf16[2,4,1280], index: 1, kind: input, shape index: {}, may-alias: {0,1}]
  %s2 = inlined_call_operand.vmem [shape: bf16[8,108], index: 2, kind: input, shape index: {}]
  %s3 = inlined_call_operand.vmem [shape: f32[8,1], index: 3, kind: input, shape index: {}]
  %s4 = inlined_call_operand.vmem [shape: f32[2,8,1024], index: 4, kind: output, shape index: {}]
  %s5 = sld [smem:[#allocation0]]
  $region49: #{basic_convolution_block.1} parent=0
    _
  %s7 = ssub.s32 1, %s5
  %s8 = scalar_select 0, %s7, %s5
  loop: start=0, step=1, limit=4
  $region2: #{basic_convolution_block.1} parent=0 // loop_pre_header
    _
  $region3: #{basic_convolution_block.1} parent=0 // loop_header
    %s10 = sphi 0, %s14
    %p11 = scmp.ge.s32.totalorder %s10, 4
    %s17 = sphi 0, %s29
    %s18 = sphi 0, %s25
    %s19 = sphi 0, %s17
    %s20 = sphi 0, %s18
    %s21 = sphi 0, %s19
    %s22 = sphi 0, %s20
    %s34 = sphi 0, %s36
    %s37 = sphi 0, %s34
    %s38 = sphi 0, %s37
    %s54 = sphi 0, %s38
    %s66 = sphi 0, %s68
    %s69 = sphi 0, %s66
    %s70 = sphi 0, %s69
    %s86 = sphi 0, %s70
    %s90 = sphi 0, %s90
    %s92 = sphi 0, %s90
    %s93 = sphi 0, %s92
    %s107 = sphi 0, %s93
    %s111 = sphi 0, %s111
    %s113 = sphi 0, %s111
    %s114 = sphi 0, %s113
    %s128 = sphi 0, %s114
    %s136 = sphi 0, %s138
    %s139 = sphi 0, %s136
    %s140 = sphi 0, %s139
    %s156 = sphi 0, %s140
  $region4: #{basic_convolution_block.1} parent=0 // loop_header_branch
    %13 = sbr.rel (%p11) target = $region8
  $region5: #{basic_convolution_block.1} parent=0 // loop_body
    %s15 = ssub.s32 %s10, 1
    %s16 = ssub.s32 %s10, 2
    %s23 = sadd.s32 1, %s18
    %p24 = scmp.ge.s32.totalorder %s23, 1
    %s25 = scalar_select %p24, 0, %s23
    %s26 = sadd.s32 1, %s17
    %s27 = scalar_select %p24, %s26, %s17
    %p28 = scmp.ge.s32.totalorder %s27, 2
    %s29 = scalar_select %p28, 0, %s27
    %s30 = ssub.s32 %s17, %s29
    %s31 = ssub.s32 %s18, %s25
    %s32 = sor.u32 %s30, %s31
    %p33 = scmp.eq.s32.totalorder %s32, 0
    %s35 = sadd.s32 %s34, 1
    %s36 = scalar_select %p33, %s34, %s35
    %p39 = pneg %p33
    %p40 = scmp.eq.s32.totalorder %s10, 1
    %p41 = por %p39, %p40
    %p42 = scmp.ne.s32.totalorder %s34, %s37
    %p43 = scmp.eq.s32.totalorder %s10, 0
    %p44 = por %p42, %p43
    %p45 = scmp.ne.s32.totalorder %s34, %s37
    %p46 = scmp.eq.s32.totalorder %s15, 1
    %p47 = por %p45, %p46
    %p48 = scmp.ne.s32.totalorder %s37, %s38
    %p49 = scmp.eq.s32.totalorder %s15, 0
    %p50 = por %p48, %p49
    %p51 = scmp.ne.s32.totalorder %s37, %s38
    %p52 = scmp.eq.s32.totalorder %s16, 1
    %p53 = por %p51, %p52
    %p55 = scmp.ne.s32.totalorder %s38, %s54
    %p56 = scmp.eq.s32.totalorder %s16, 0
    %p57 = por %p55, %p56
    %s58 = sadd.s32 %s18, 1
    %s59 = smul.u32 %s58, 4
    %s60 = sadd.s32 %s25, 1
    %s61 = smul.u32 %s60, 4
    %s62 = ssub.s32 %s17, %s29
    %s63 = ssub.s32 %s59, %s61
    %s64 = sor.u32 %s62, %s63
    %p65 = scmp.eq.s32.totalorder %s64, 0
    %s67 = sadd.s32 %s66, 1
    %s68 = scalar_select %p65, %s66, %s67
    %p71 = pneg %p65
    %p72 = scmp.eq.s32.totalorder %s10, 1
    %p73 = por %p71, %p72
    %p74 = scmp.ne.s32.totalorder %s66, %s69
    %p75 = scmp.eq.s32.totalorder %s10, 0
    %p76 = por %p74, %p75
    %p77 = scmp.ne.s32.totalorder %s66, %s69
    %p78 = scmp.eq.s32.totalorder %s15, 1
    %p79 = por %p77, %p78
    %p80 = scmp.ne.s32.totalorder %s69, %s70
    %p81 = scmp.eq.s32.totalorder %s15, 0
    %p82 = por %p80, %p81
    %p83 = scmp.ne.s32.totalorder %s69, %s70
    %p84 = scmp.eq.s32.totalorder %s16, 1
    %p85 = por %p83, %p84
    %p87 = scmp.ne.s32.totalorder %s70, %s86
    %p88 = scmp.eq.s32.totalorder %s16, 0
    %p89 = por %p87, %p88
    %s91 = sadd.s32 %s90, 1
    %p94 = scmp.eq.s32.totalorder %s10, 1
    %p95 = scmp.ne.s32.totalorder %s90, %s92
    %p96 = scmp.eq.s32.totalorder %s10, 0
    %p97 = por %p95, %p96
    %p98 = scmp.ne.s32.totalorder %s90, %s92
    %p99 = scmp.eq.s32.totalorder %s15, 1
    %p100 = por %p98, %p99
    %p101 = scmp.ne.s32.totalorder %s92, %s93
    %p102 = scmp.eq.s32.totalorder %s15, 0
    %p103 = por %p101, %p102
    %p104 = scmp.ne.s32.totalorder %s92, %s93
    %p105 = scmp.eq.s32.totalorder %s16, 1
    %p106 = por %p104, %p105
    %p108 = scmp.ne.s32.totalorder %s93, %s107
    %p109 = scmp.eq.s32.totalorder %s16, 0
    %p110 = por %p108, %p109
    %s112 = sadd.s32 %s111, 1
    %p115 = scmp.eq.s32.totalorder %s10, 1
    %p116 = scmp.ne.s32.totalorder %s111, %s113
    %p117 = scmp.eq.s32.totalorder %s10, 0
    %p118 = por %p116, %p117
    %p119 = scmp.ne.s32.totalorder %s111, %s113
    %p120 = scmp.eq.s32.totalorder %s15, 1
    %p121 = por %p119, %p120
    %p122 = scmp.ne.s32.totalorder %s113, %s114
    %p123 = scmp.eq.s32.totalorder %s15, 0
    %p124 = por %p122, %p123
    %p125 = scmp.ne.s32.totalorder %s113, %s114
    %p126 = scmp.eq.s32.totalorder %s16, 1
    %p127 = por %p125, %p126
    %p129 = scmp.ne.s32.totalorder %s114, %s128
    %p130 = scmp.eq.s32.totalorder %s16, 0
    %p131 = por %p129, %p130
    %s132 = ssub.s32 %s17, %s29
    %s133 = ssub.s32 %s18, %s25
    %s134 = sor.u32 %s132, %s133
    %p135 = scmp.eq.s32.totalorder %s134, 0
    %s137 = sadd.s32 %s136, 1
    %s138 = scalar_select %p135, %s136, %s137
    %p141 = pneg %p135
    %p142 = scmp.eq.s32.totalorder %s10, 1
    %p143 = por %p141, %p142
    %p144 = scmp.ne.s32.totalorder %s136, %s139
    %p145 = scmp.eq.s32.totalorder %s10, 0
    %p146 = por %p144, %p145
    %p147 = scmp.ne.s32.totalorder %s136, %s139
    %p148 = scmp.eq.s32.totalorder %s15, 1
    %p149 = por %p147, %p148
    %p150 = scmp.ne.s32.totalorder %s139, %s140
    %p151 = scmp.eq.s32.totalorder %s15, 0
    %p152 = por %p150, %p151
    %p153 = scmp.ne.s32.totalorder %s139, %s140
    %p154 = scmp.eq.s32.totalorder %s16, 1
    %p155 = por %p153, %p154
    %p157 = scmp.ne.s32.totalorder %s140, %s156
    %p158 = scmp.eq.s32.totalorder %s16, 0
    %p159 = por %p157, %p158
    %p160 = scmp.le.s32.totalorder 1, %s10
    %p161 = scmp.lt.s32.totalorder %s10, 3
    %p162 = pnand %p160, %p161
    %p163 = pneg %p162
    // Predicated region
    $region9: #{basic_convolution_block.1} parent=5 // pred_check
      _
    $region10: #{basic_convolution_block.1} parent=5 // pred_check_branch
      %165 = sbr.rel (%p162) target = $region12
    $region11: #{basic_convolution_block.1} parent=5 // pred_region
      %s166 = ssub.s32 %s10, 1
      // Predicated region
      $region13: #{basic_convolution_block.1} parent=11 // pred_check
        %p167 = pneg %p103
      $region14: #{basic_convolution_block.1} parent=11 // pred_check_branch
        %169 = sbr.rel (%p167) target = $region16
      $region15: #{basic_convolution_block.1} parent=11 // pred_region
        _
      $region16: #{basic_convolution_block.1} parent=11 // pred_fallthru
        _
      // Predicated region
      $region17: #{basic_convolution_block.1} parent=11 // pred_check
        %p170 = pneg %p124
      $region18: #{basic_convolution_block.1} parent=11 // pred_check_branch
        %172 = sbr.rel (%p170) target = $region20
      $region19: #{basic_convolution_block.1} parent=11 // pred_region
        _
      $region20: #{basic_convolution_block.1} parent=11 // pred_fallthru
        _
    $region12: #{basic_convolution_block.1} parent=5 // pred_fallthru
      _
    %p173 = scmp.lt.s32.totalorder %s10, 2
    // Predicated region
    $region21: #{basic_convolution_block.1} parent=5 // pred_check
      %p174 = pneg %p173
    $region22: #{basic_convolution_block.1} parent=5 // pred_check_branch
      %176 = sbr.rel (%p174) target = $region24
    $region23: #{basic_convolution_block.1} parent=5 // pred_region
      // Predicated region
      $region25: #{basic_convolution_block.1} parent=23 // pred_check
        %p177 = pneg %p44
      $region26: #{basic_convolution_block.1} parent=23 // pred_check_branch
        %179 = sbr.rel (%p177) target = $region28
      $region27: #{basic_convolution_block.1} parent=23 // pred_region
        %s180 = smul.u32 8, %s18
        %s181 = ssub.s32 10, %s180
        %p182 = scmp.lt.s32.totalorder %s181, 8
        %s183 = scalar_select %p182, %s181, 8
        %s184 = smul.u32 32, %s183
        %p185 = scmp.lt.s32.totalorder %s17, 1
        %s186 = scalar_select %p185, %s17, 1
        %p187 = scmp.lt.s32.totalorder %s180, 9
        %s188 = scalar_select %p187, %s180, 9
        %s189 = smul.addr %s186, 10
        %s190 = sadd.s32 %s188, %s189
        %s191 = smul.addr %s190, 2
        %s192 = scalar_lea.vmem %s0, %s191
        %s193 = smul.u32 8, %s18
        %s194 = ssub.s32 10, %s193
        %p195 = scmp.lt.s32.totalorder %s194, 8
        %s196 = scalar_select %p195, %s194, 8
        %s197 = smul.u32 32, %s196
      $region28: #{basic_convolution_block.1} parent=23 // pred_fallthru
        _
      // Predicated region
      $region29: #{basic_convolution_block.1} parent=23 // pred_check
        %p198 = pneg %p76
      $region30: #{basic_convolution_block.1} parent=23 // pred_check_branch
        %200 = sbr.rel (%p198) target = $region32
      $region31: #{basic_convolution_block.1} parent=23 // pred_region
        %s201 = sadd.s32 %s18, 1
        %s202 = smul.u32 %s201, 4
        %s203 = smul.u32 2, %s202
        %p204 = scmp.lt.s32.totalorder %s17, 1
        %s205 = scalar_select %p204, %s17, 1
        %p206 = scmp.lt.s32.totalorder %s203, 9
        %s207 = scalar_select %p206, %s203, 9
        %s208 = smul.addr %s205, 10
        %s209 = sadd.s32 %s207, %s208
        %s210 = smul.addr %s209, 2
        %s211 = scalar_lea.vmem %s1, %s210
        %s212 = sadd.s32 %s18, 1
        %s213 = smul.u32 %s212, 4
        %s214 = smul.u32 2, %s213
      $region32: #{basic_convolution_block.1} parent=23 // pred_fallthru
        _
    $region24: #{basic_convolution_block.1} parent=5 // pred_fallthru
      _
    %p215 = scmp.le.s32.totalorder 1, %s10
    %p216 = scmp.lt.s32.totalorder %s10, 3
    %p217 = pnand %p215, %p216
    %p218 = pneg %p217
    // Predicated region
    $region33: #{basic_convolution_block.1} parent=5 // pred_check
      _
    $region34: #{basic_convolution_block.1} parent=5 // pred_check_branch
      %220 = sbr.rel (%p217) target = $region36
    $region35: #{basic_convolution_block.1} parent=5 // pred_region
      %s221 = ssub.s32 %s10, 1
      %s222 = smul.u32 8, %s20
      %s223 = ssub.s32 10, %s222
      %p224 = scmp.lt.s32.totalorder %s223, 8
      %s225 = scalar_select %p224, %s223, 8
      %s226 = smul.u32 32, %s225
      %p227 = scmp.lt.s32.totalorder %s19, 1
      %s228 = scalar_select %p227, %s19, 1
      %p229 = scmp.lt.s32.totalorder %s222, 9
      %s230 = scalar_select %p229, %s222, 9
      %s231 = smul.addr %s228, 10
      %s232 = sadd.s32 %s230, %s231
      %s233 = smul.addr %s232, 2
      %s234 = scalar_lea.vmem %s0, %s233
      %p235 = pneg %p50
      %p236 = pneg %p47
      %s237 = sadd.s32 %s20, 1
      %s238 = smul.u32 %s237, 4
      %s239 = smul.u32 2, %s238
      %p240 = scmp.lt.s32.totalorder %s19, 1
      %s241 = scalar_select %p240, %s19, 1
      %p242 = scmp.lt.s32.totalorder %s239, 9
      %s243 = scalar_select %p242, %s239, 9
      %s244 = smul.addr %s241, 10
      %s245 = sadd.s32 %s243, %s244
      %s246 = smul.addr %s245, 2
      %s247 = scalar_lea.vmem %s1, %s246
      %p248 = pneg %p82
      %p249 = pneg %p79
      %p250 = pneg %p103
      %p251 = pneg %p100
      %p252 = pneg %p124
      %p253 = pneg %p121
      %p254 = pneg %p152
      %p255 = pneg %p149
      %s256 = smul.u32 8, %s20
      %p257 = scmp.lt.s32.totalorder %s19, 1
      %s258 = scalar_select %p257, %s19, 1
      %p259 = scmp.lt.s32.totalorder %s256, 7
      %s260 = scalar_select %p259, %s256, 7
      %s261 = smul.addr %s258, 8
      %s262 = sadd.s32 %s260, %s261
      %s263 = smul.addr %s262, 8
      %s264 = scalar_lea.vmem %s4, %s263
      %s265 = smul.u32 8, %s20
      %s266 = ssub.s32 10, %s265
      %p267 = scmp.lt.s32.totalorder %s266, 8
      %s268 = scalar_select %p267, %s266, 8
      %s269 = smul.u32 32, %s268
      %p270 = scmp.lt.s32.totalorder %s19, 1
      %s271 = scalar_select %p270, %s19, 1
      %p272 = scmp.lt.s32.totalorder %s265, 9
      %s273 = scalar_select %p272, %s265, 9
      %s274 = smul.addr %s271, 10
      %s275 = sadd.s32 %s273, %s274
      %s276 = smul.addr %s275, 2
      %s277 = scalar_lea.vmem %s0, %s276
      %s278 = smul.u32 8, %s20
      %s279 = ssub.s32 10, %s278
      %p280 = scmp.lt.s32.totalorder %s279, 8
      %s281 = scalar_select %p280, %s279, 8
      %s282 = smul.u32 32, %s281
      %s283 = sadd.s32 %s20, 1
      %s284 = smul.u32 %s283, 4
      %s285 = smul.u32 2, %s284
      %p286 = scmp.lt.s32.totalorder %s19, 1
      %s287 = scalar_select %p286, %s19, 1
      %p288 = scmp.lt.s32.totalorder %s285, 9
      %s289 = scalar_select %p288, %s285, 9
      %s290 = smul.addr %s287, 10
      %s291 = sadd.s32 %s289, %s290
      %s292 = smul.addr %s291, 2
      %s293 = scalar_lea.vmem %s1, %s292
      %s294 = sadd.s32 %s20, 1
      %s295 = smul.u32 %s294, 4
      %s296 = smul.u32 2, %s295
      %s297 = smul.u32 8, %s20
      %p298 = scmp.lt.s32.totalorder %s19, 1
      %s299 = scalar_select %p298, %s19, 1
      %p300 = scmp.lt.s32.totalorder %s297, 7
      %s301 = scalar_select %p300, %s297, 7
      %s302 = smul.addr %s299, 8
      %s303 = sadd.s32 %s301, %s302
      %s304 = smul.addr %s303, 8
      %s305 = scalar_lea.vmem %s4, %s304
      %s306 = smul.u32 8, %s20
      %v308 = vld [vmem:[%s277] sm:$0xff]
      %v309 = vld [vmem:[%s277 + $0x8] sm:$0xff]
      %v310 = vld [vmem:[%s293] sm:$0xf]
      %v313 = vcombine.high %v308, %v308
      %v315 = vunpack.c.l.s4 1983009808
      %v316 = vunpack.c.0.s8 %v315
      %v317 = vlaneseq
      %v318 = vshrl.u32 %v317, 7
      %v319 = vsub.s32 %v316, %v318
      %v320 = vrot.slane %v308, %v319
      %v322 = vunpack.c.l.s4 1983009808
      %v323 = vunpack.c.0.s8 %v322
      %v324 = vlaneseq
      %v325 = vshrl.u32 %v324, 7
      %v326 = vsub.s32 %v323, %v325
      %v327 = vrot.slane %v313, %v326
      %v328 = vcombine.high %v320, %v320
      %v329 = vcombine.high %v327, %v327
      %v330 = vcombine.high %v309, %v309
      %v332 = vunpack.c.l.s4 1983009808
      %v333 = vunpack.c.0.s8 %v332
      %v334 = vlaneseq
      %v335 = vshrl.u32 %v334, 7
      %v336 = vsub.s32 %v333, %v335
      %v337 = vrot.slane %v309, %v336
      %v339 = vunpack.c.l.s4 1983009808
      %v340 = vunpack.c.0.s8 %v339
      %v341 = vlaneseq
      %v342 = vshrl.u32 %v341, 7
      %v343 = vsub.s32 %v340, %v342
      %v344 = vrot.slane %v330, %v343
      %v345 = vcombine.high %v337, %v337
      %v346 = vcombine.high %v344, %v344
      %v349 = vunpack.c.l.s4 1983009808
      %v350 = vunpack.c.0.s8 %v349
      %v351 = vlaneseq
      %v352 = vshrl.u32 %v351, 7
      %v353 = vsub.s32 %v350, %v352
      %v354 = vrot.slane %v310, %v353
      %v355 = vcombine.high %v354, %v354
      %v356 = vrot.slane %v320, 6
      %v357 = vrot.slane %v328, 6
      %v358 = vrot.slane %v327, 6
      %v359 = vrot.slane %v329, 6
      %v360 = vrot.slane %v337, 6
      %v361 = vrot.slane %v345, 6
      %v362 = vrot.slane %v344, 6
      %v363 = vrot.slane %v346, 6
      %v364 = vrot.slane %v354, 6
      %365 = vrot.lane.b32.xlu0 %v356, 127
      %v366 = vpop.permute.xlu0 %365
      %367 = vrot.lane.b32.xlu0 %v357, 127
      %v368 = vpop.permute.xlu0 %367
      %369 = vrot.lane.b32.xlu0 %v358, 127
      %v370 = vpop.permute.xlu0 %369
      %371 = vrot.lane.b32.xlu0 %v359, 127
      %v372 = vpop.permute.xlu0 %371
      %373 = vrot.lane.b32.xlu0 %v360, 127
      %v374 = vpop.permute.xlu0 %373
      %375 = vrot.lane.b32.xlu0 %v361, 127
      %v376 = vpop.permute.xlu0 %375
      %377 = vrot.lane.b32.xlu0 %v362, 127
      %v378 = vpop.permute.xlu0 %377
      %379 = vrot.lane.b32.xlu0 %v363, 127
      %v380 = vpop.permute.xlu0 %379
      %381 = vrot.lane.b32.xlu0 %v364, 127
      %v382 = vpop.permute.xlu0 %381
      %vm383 = vcmask 1039360
      %v384 = vsel %vm383, %v366, %v368
      %v385 = vsel %vm383, %v368, %v370
      %v386 = vsel %vm383, %v370, %v372
      %v387 = vsel %vm383, %v372, %v374
      %v388 = vsel %vm383, %v374, %v376
      %v389 = vsel %vm383, %v376, %v378
      %v390 = vsel %vm383, %v378, %v380
      %v391 = vsel %vm383, %v380, %v382
      %v392 = vrot.slane %v320, 4
      %v393 = vrot.slane %v328, 4
      %v394 = vrot.slane %v327, 4
      %v395 = vrot.slane %v329, 4
      %v396 = vrot.slane %v337, 4
      %v397 = vrot.slane %v345, 4
      %v398 = vrot.slane %v344, 4
      %v399 = vrot.slane %v346, 4
      %v400 = vrot.slane %v354, 4
      %401 = vrot.lane.b32.xlu0 %v392, 126
      %v402 = vpop.permute.xlu0 %401
      %403 = vrot.lane.b32.xlu0 %v393, 126
      %v404 = vpop.permute.xlu0 %403
      %405 = vrot.lane.b32.xlu0 %v394, 126
      %v406 = vpop.permute.xlu0 %405
      %407 = vrot.lane.b32.xlu0 %v395, 126
      %v408 = vpop.permute.xlu0 %407
      %409 = vrot.lane.b32.xlu0 %v396, 126
      %v410 = vpop.permute.xlu0 %409
      %411 = vrot.lane.b32.xlu0 %v397, 126
      %v412 = vpop.permute.xlu0 %411
      %413 = vrot.lane.b32.xlu0 %v398, 126
      %v414 = vpop.permute.xlu0 %413
      %415 = vrot.lane.b32.xlu0 %v399, 126
      %v416 = vpop.permute.xlu0 %415
      %417 = vrot.lane.b32.xlu0 %v400, 126
      %v418 = vpop.permute.xlu0 %417
      %vm419 = vcmask 1031168
      %v420 = vsel %vm419, %v402, %v404
      %v421 = vsel %vm419, %v404, %v406
      %v422 = vsel %vm419, %v406, %v408
      %v423 = vsel %vm419, %v408, %v410
      %v424 = vsel %vm419, %v410, %v412
      %v425 = vsel %vm419, %v412, %v414
      %v426 = vsel %vm419, %v414, %v416
      %v427 = vsel %vm419, %v416, %v418
      %v428 = vrot.slane %v320, 2
      %v429 = vrot.slane %v328, 2
      %v430 = vrot.slane %v327, 2
      %v431 = vrot.slane %v329, 2
      %v432 = vrot.slane %v337, 2
      %v433 = vrot.slane %v345, 2
      %v434 = vrot.slane %v344, 2
      %v435 = vrot.slane %v346, 2
      %v436 = vrot.slane %v354, 2
      %437 = vrot.lane.b32.xlu0 %v428, 118
      %v438 = vpop.permute.xlu0 %437
      %439 = vrot.lane.b32.xlu0 %v429, 118
      %v440 = vpop.permute.xlu0 %439
      %441 = vrot.lane.b32.xlu0 %v430, 118
      %v442 = vpop.permute.xlu0 %441
      %443 = vrot.lane.b32.xlu0 %v431, 118
      %v444 = vpop.permute.xlu0 %443
      %445 = vrot.lane.b32.xlu0 %v432, 118
      %v446 = vpop.permute.xlu0 %445
      %447 = vrot.lane.b32.xlu0 %v433, 118
      %v448 = vpop.permute.xlu0 %447
      %449 = vrot.lane.b32.xlu0 %v434, 118
      %v450 = vpop.permute.xlu0 %449
      %451 = vrot.lane.b32.xlu0 %v435, 118
      %v452 = vpop.permute.xlu0 %451
      %453 = vrot.lane.b32.xlu0 %v436, 118
      %v454 = vpop.permute.xlu0 %453
      %vm455 = vcmask 965632
      %v456 = vsel %vm455, %v438, %v440
      %v457 = vsel %vm455, %v440, %v442
      %v458 = vsel %vm455, %v442, %v444
      %v459 = vsel %vm455, %v444, %v446
      %v460 = vsel %vm455, %v446, %v448
      %v461 = vsel %vm455, %v448, %v450
      %v462 = vsel %vm455, %v450, %v452
      %v463 = vsel %vm455, %v452, %v454
      %464 = vrot.lane.b32.xlu0 %v320, 117
      %v465 = vpop.permute.xlu0 %464
      %466 = vrot.lane.b32.xlu0 %v328, 117
      %v467 = vpop.permute.xlu0 %466
      %468 = vrot.lane.b32.xlu0 %v327, 117
      %v469 = vpop.permute.xlu0 %468
      %470 = vrot.lane.b32.xlu0 %v329, 117
      %v471 = vpop.permute.xlu0 %470
      %472 = vrot.lane.b32.xlu0 %v337, 117
      %v473 = vpop.permute.xlu0 %472
      %474 = vrot.lane.b32.xlu0 %v345, 117
      %v475 = vpop.permute.xlu0 %474
      %476 = vrot.lane.b32.xlu0 %v344, 117
      %v477 = vpop.permute.xlu0 %476
      %478 = vrot.lane.b32.xlu0 %v346, 117
      %v479 = vpop.permute.xlu0 %478
      %480 = vrot.lane.b32.xlu0 %v354, 117
      %v481 = vpop.permute.xlu0 %480
      %vm482 = vcmask 957440
      %v483 = vsel %vm482, %v465, %v467
      %v484 = vsel %vm482, %v467, %v469
      %v485 = vsel %vm482, %v469, %v471
      %v486 = vsel %vm482, %v471, %v473
      %v487 = vsel %vm482, %v473, %v475
      %v488 = vsel %vm482, %v475, %v477
      %v489 = vsel %vm482, %v477, %v479
      %v490 = vsel %vm482, %v479, %v481
      %491 = vrot.lane.b32.xlu0 %v356, 116
      %v492 = vpop.permute.xlu0 %491
      %493 = vrot.lane.b32.xlu0 %v357, 116
      %v494 = vpop.permute.xlu0 %493
      %495 = vrot.lane.b32.xlu0 %v358, 116
      %v496 = vpop.permute.xlu0 %495
      %497 = vrot.lane.b32.xlu0 %v359, 116
      %v498 = vpop.permute.xlu0 %497
      %499 = vrot.lane.b32.xlu0 %v360, 116
      %v500 = vpop.permute.xlu0 %499
      %501 = vrot.lane.b32.xlu0 %v361, 116
      %v502 = vpop.permute.xlu0 %501
      %503 = vrot.lane.b32.xlu0 %v362, 116
      %v504 = vpop.permute.xlu0 %503
      %505 = vrot.lane.b32.xlu0 %v363, 116
      %v506 = vpop.permute.xlu0 %505
      %507 = vrot.lane.b32.xlu0 %v364, 116
      %v508 = vpop.permute.xlu0 %507
      %vm509 = vcmask 949248
      %v510 = vsel %vm509, %v492, %v494
      %v511 = vsel %vm509, %v494, %v496
      %v512 = vsel %vm509, %v496, %v498
      %v513 = vsel %vm509, %v498, %v500
      %v514 = vsel %vm509, %v500, %v502
      %v515 = vsel %vm509, %v502, %v504
      %v516 = vsel %vm509, %v504, %v506
      %v517 = vsel %vm509, %v506, %v508
      %518 = vrot.lane.b32.xlu0 %v392, 108
      %v519 = vpop.permute.xlu0 %518
      %520 = vrot.lane.b32.xlu0 %v393, 108
      %v521 = vpop.permute.xlu0 %520
      %522 = vrot.lane.b32.xlu0 %v394, 108
      %v523 = vpop.permute.xlu0 %522
      %524 = vrot.lane.b32.xlu0 %v395, 108
      %v525 = vpop.permute.xlu0 %524
      %526 = vrot.lane.b32.xlu0 %v396, 108
      %v527 = vpop.permute.xlu0 %526
      %528 = vrot.lane.b32.xlu0 %v397, 108
      %v529 = vpop.permute.xlu0 %528
      %530 = vrot.lane.b32.xlu0 %v398, 108
      %v531 = vpop.permute.xlu0 %530
      %532 = vrot.lane.b32.xlu0 %v399, 108
      %v533 = vpop.permute.xlu0 %532
      %534 = vrot.lane.b32.xlu0 %v400, 108
      %v535 = vpop.permute.xlu0 %534
      %vm536 = vcmask 883712
      %v537 = vsel %vm536, %v519, %v521
      %v538 = vsel %vm536, %v521, %v523
      %v539 = vsel %vm536, %v523, %v525
      %v540 = vsel %vm536, %v525, %v527
      %v541 = vsel %vm536, %v527, %v529
      %v542 = vsel %vm536, %v529, %v531
      %v543 = vsel %vm536, %v531, %v533
      %v544 = vsel %vm536, %v533, %v535
      %545 = vrot.lane.b32.xlu0 %v428, 107
      %v546 = vpop.permute.xlu0 %545
      %547 = vrot.lane.b32.xlu0 %v429, 107
      %v548 = vpop.permute.xlu0 %547
      %549 = vrot.lane.b32.xlu0 %v430, 107
      %v550 = vpop.permute.xlu0 %549
      %551 = vrot.lane.b32.xlu0 %v431, 107
      %v552 = vpop.permute.xlu0 %551
      %553 = vrot.lane.b32.xlu0 %v432, 107
      %v554 = vpop.permute.xlu0 %553
      %555 = vrot.lane.b32.xlu0 %v433, 107
      %v556 = vpop.permute.xlu0 %555
      %557 = vrot.lane.b32.xlu0 %v434, 107
      %v558 = vpop.permute.xlu0 %557
      %559 = vrot.lane.b32.xlu0 %v435, 107
      %v560 = vpop.permute.xlu0 %559
      %561 = vrot.lane.b32.xlu0 %v436, 107
      %v562 = vpop.permute.xlu0 %561
      %vm563 = vcmask 875520
      %v564 = vsel %vm563, %v546, %v548
      %v565 = vsel %vm563, %v548, %v550
      %v566 = vsel %vm563, %v550, %v552
      %v567 = vsel %vm563, %v552, %v554
      %v568 = vsel %vm563, %v554, %v556
      %v569 = vsel %vm563, %v556, %v558
      %v570 = vsel %vm563, %v558, %v560
      %v571 = vsel %vm563, %v560, %v562
      %572 = vrot.lane.b32.xlu0 %v320, 106
      %v573 = vpop.permute.xlu0 %572
      %574 = vrot.lane.b32.xlu0 %v328, 106
      %v575 = vpop.permute.xlu0 %574
      %576 = vrot.lane.b32.xlu0 %v327, 106
      %v577 = vpop.permute.xlu0 %576
      %578 = vrot.lane.b32.xlu0 %v329, 106
      %v579 = vpop.permute.xlu0 %578
      %580 = vrot.lane.b32.xlu0 %v337, 106
      %v581 = vpop.permute.xlu0 %580
      %582 = vrot.lane.b32.xlu0 %v345, 106
      %v583 = vpop.permute.xlu0 %582
      %584 = vrot.lane.b32.xlu0 %v344, 106
      %v585 = vpop.permute.xlu0 %584
      %586 = vrot.lane.b32.xlu0 %v346, 106
      %v587 = vpop.permute.xlu0 %586
      %588 = vrot.lane.b32.xlu0 %v354, 106
      %v589 = vpop.permute.xlu0 %588
      %vm590 = vcmask 867328
      %v591 = vsel %vm590, %v573, %v575
      %v592 = vsel %vm590, %v575, %v577
      %v593 = vsel %vm590, %v577, %v579
      %v594 = vsel %vm590, %v579, %v581
      %v595 = vsel %vm590, %v581, %v583
      %v596 = vsel %vm590, %v583, %v585
      %v597 = vsel %vm590, %v585, %v587
      %v598 = vsel %vm590, %v587, %v589
      %599 = vrot.lane.b32.xlu0 %v356, 28
      %v600 = vpop.permute.xlu0 %599
      %601 = vrot.lane.b32.xlu0 %v357, 28
      %v602 = vpop.permute.xlu0 %601
      %603 = vrot.lane.b32.xlu0 %v358, 28
      %v604 = vpop.permute.xlu0 %603
      %605 = vrot.lane.b32.xlu0 %v359, 28
      %v606 = vpop.permute.xlu0 %605
      %607 = vrot.lane.b32.xlu0 %v360, 28
      %v608 = vpop.permute.xlu0 %607
      %609 = vrot.lane.b32.xlu0 %v361, 28
      %v610 = vpop.permute.xlu0 %609
      %611 = vrot.lane.b32.xlu0 %v362, 28
      %v612 = vpop.permute.xlu0 %611
      %613 = vrot.lane.b32.xlu0 %v363, 28
      %v614 = vpop.permute.xlu0 %613
      %615 = vrot.lane.b32.xlu0 %v364, 28
      %v616 = vpop.permute.xlu0 %615
      %vm617 = vcmask 228352
      %v618 = vsel %vm617, %v600, %v602
      %v619 = vsel %vm617, %v602, %v604
      %v620 = vsel %vm617, %v604, %v606
      %v621 = vsel %vm617, %v606, %v608
      %v622 = vsel %vm617, %v608, %v610
      %v623 = vsel %vm617, %v610, %v612
      %v624 = vsel %vm617, %v612, %v614
      %v625 = vsel %vm617, %v614, %v616
      %626 = vrot.lane.b32.xlu0 %v392, 27
      %v627 = vpop.permute.xlu0 %626
      %628 = vrot.lane.b32.xlu0 %v393, 27
      %v629 = vpop.permute.xlu0 %628
      %630 = vrot.lane.b32.xlu0 %v394, 27
      %v631 = vpop.permute.xlu0 %630
      %632 = vrot.lane.b32.xlu0 %v395, 27
      %v633 = vpop.permute.xlu0 %632
      %634 = vrot.lane.b32.xlu0 %v396, 27
      %v635 = vpop.permute.xlu0 %634
      %636 = vrot.lane.b32.xlu0 %v397, 27
      %v637 = vpop.permute.xlu0 %636
      %638 = vrot.lane.b32.xlu0 %v398, 27
      %v639 = vpop.permute.xlu0 %638
      %640 = vrot.lane.b32.xlu0 %v399, 27
      %v641 = vpop.permute.xlu0 %640
      %642 = vrot.lane.b32.xlu0 %v400, 27
      %v643 = vpop.permute.xlu0 %642
      %vm644 = vcmask 220160
      %v645 = vsel %vm644, %v627, %v629
      %v646 = vsel %vm644, %v629, %v631
      %v647 = vsel %vm644, %v631, %v633
      %v648 = vsel %vm644, %v633, %v635
      %v649 = vsel %vm644, %v635, %v637
      %v650 = vsel %vm644, %v637, %v639
      %v651 = vsel %vm644, %v639, %v641
      %v652 = vsel %vm644, %v641, %v643
      %653 = vrot.lane.b32.xlu0 %v428, 26
      %v654 = vpop.permute.xlu0 %653
      %655 = vrot.lane.b32.xlu0 %v429, 26
      %v656 = vpop.permute.xlu0 %655
      %657 = vrot.lane.b32.xlu0 %v430, 26
      %v658 = vpop.permute.xlu0 %657
      %659 = vrot.lane.b32.xlu0 %v431, 26
      %v660 = vpop.permute.xlu0 %659
      %661 = vrot.lane.b32.xlu0 %v432, 26
      %v662 = vpop.permute.xlu0 %661
      %663 = vrot.lane.b32.xlu0 %v433, 26
      %v664 = vpop.permute.xlu0 %663
      %665 = vrot.lane.b32.xlu0 %v434, 26
      %v666 = vpop.permute.xlu0 %665
      %667 = vrot.lane.b32.xlu0 %v435, 26
      %v668 = vpop.permute.xlu0 %667
      %669 = vrot.lane.b32.xlu0 %v436, 26
      %v670 = vpop.permute.xlu0 %669
      %vm671 = vcmask 211968
      %v672 = vsel %vm671, %v654, %v656
      %v673 = vsel %vm671, %v656, %v658
      %v674 = vsel %vm671, %v658, %v660
      %v675 = vsel %vm671, %v660, %v662
      %v676 = vsel %vm671, %v662, %v664
      %v677 = vsel %vm671, %v664, %v666
      %v678 = vsel %vm671, %v666, %v668
      %v679 = vsel %vm671, %v668, %v670
      %680 = vrot.lane.b32.xlu0 %v320, 18
      %v681 = vpop.permute.xlu0 %680
      %682 = vrot.lane.b32.xlu0 %v328, 18
      %v683 = vpop.permute.xlu0 %682
      %684 = vrot.lane.b32.xlu0 %v327, 18
      %v685 = vpop.permute.xlu0 %684
      %686 = vrot.lane.b32.xlu0 %v329, 18
      %v687 = vpop.permute.xlu0 %686
      %688 = vrot.lane.b32.xlu0 %v337, 18
      %v689 = vpop.permute.xlu0 %688
      %690 = vrot.lane.b32.xlu0 %v345, 18
      %v691 = vpop.permute.xlu0 %690
      %692 = vrot.lane.b32.xlu0 %v344, 18
      %v693 = vpop.permute.xlu0 %692
      %694 = vrot.lane.b32.xlu0 %v346, 18
      %v695 = vpop.permute.xlu0 %694
      %696 = vrot.lane.b32.xlu0 %v354, 18
      %v697 = vpop.permute.xlu0 %696
      %vm698 = vcmask 146432
      %v699 = vsel %vm698, %v681, %v683
      %v700 = vsel %vm698, %v683, %v685
      %v701 = vsel %vm698, %v685, %v687
      %v702 = vsel %vm698, %v687, %v689
      %v703 = vsel %vm698, %v689, %v691
      %v704 = vsel %vm698, %v691, %v693
      %v705 = vsel %vm698, %v693, %v695
      %v706 = vsel %vm698, %v695, %v697
      %707 = vrot.lane.b32.xlu0 %v357, 17
      %v708 = vpop.permute.xlu0 %707
      %709 = vrot.lane.b32.xlu0 %v358, 17
      %v710 = vpop.permute.xlu0 %709
      %711 = vrot.lane.b32.xlu0 %v359, 17
      %v712 = vpop.permute.xlu0 %711
      %713 = vrot.lane.b32.xlu0 %v360, 17
      %v714 = vpop.permute.xlu0 %713
      %715 = vrot.lane.b32.xlu0 %v361, 17
      %v716 = vpop.permute.xlu0 %715
      %717 = vrot.lane.b32.xlu0 %v362, 17
      %v718 = vpop.permute.xlu0 %717
      %719 = vrot.lane.b32.xlu0 %v363, 17
      %v720 = vpop.permute.xlu0 %719
      %721 = vrot.lane.b32.xlu0 %v364, 17
      %v722 = vpop.permute.xlu0 %721
      %vm723 = vcmask 138240
      %v724 = vsel %vm723, %v708, %v710
      %v725 = vsel %vm723, %v710, %v712
      %v726 = vsel %vm723, %v712, %v714
      %v727 = vsel %vm723, %v714, %v716
      %v728 = vsel %vm723, %v716, %v718
      %v729 = vsel %vm723, %v718, %v720
      %v730 = vsel %vm723, %v720, %v722
      %v731 = vrot.slane %v355, 4
      %732 = vrot.lane.b32.xlu0 %v393, 16
      %v733 = vpop.permute.xlu0 %732
      %734 = vrot.lane.b32.xlu0 %v394, 16
      %v735 = vpop.permute.xlu0 %734
      %736 = vrot.lane.b32.xlu0 %v395, 16
      %v737 = vpop.permute.xlu0 %736
      %738 = vrot.lane.b32.xlu0 %v396, 16
      %v739 = vpop.permute.xlu0 %738
      %740 = vrot.lane.b32.xlu0 %v397, 16
      %v741 = vpop.permute.xlu0 %740
      %742 = vrot.lane.b32.xlu0 %v398, 16
      %v743 = vpop.permute.xlu0 %742
      %744 = vrot.lane.b32.xlu0 %v399, 16
      %v745 = vpop.permute.xlu0 %744
      %746 = vrot.lane.b32.xlu0 %v400, 16
      %v747 = vpop.permute.xlu0 %746
      %748 = vrot.lane.b32.xlu0 %v731, 16
      %v749 = vpop.permute.xlu0 %748
      %vm750 = vcmask 130048
      %v751 = vsel %vm750, %v733, %v735
      %v752 = vsel %vm750, %v735, %v737
      %v753 = vsel %vm750, %v737, %v739
      %v754 = vsel %vm750, %v739, %v741
      %v755 = vsel %vm750, %v741, %v743
      %v756 = vsel %vm750, %v743, %v745
      %v757 = vsel %vm750, %v745, %v747
      %v758 = vsel %vm750, %v747, %v749
      %v759 = vrot.slane %v355, 2
      %760 = vrot.lane.b32.xlu0 %v429, 8
      %v761 = vpop.permute.xlu0 %760
      %762 = vrot.lane.b32.xlu0 %v430, 8
      %v763 = vpop.permute.xlu0 %762
      %764 = vrot.lane.b32.xlu0 %v431, 8
      %v765 = vpop.permute.xlu0 %764
      %766 = vrot.lane.b32.xlu0 %v432, 8
      %v767 = vpop.permute.xlu0 %766
      %768 = vrot.lane.b32.xlu0 %v433, 8
      %v769 = vpop.permute.xlu0 %768
      %770 = vrot.lane.b32.xlu0 %v434, 8
      %v771 = vpop.permute.xlu0 %770
      %772 = vrot.lane.b32.xlu0 %v435, 8
      %v773 = vpop.permute.xlu0 %772
      %774 = vrot.lane.b32.xlu0 %v436, 8
      %v775 = vpop.permute.xlu0 %774
      %776 = vrot.lane.b32.xlu0 %v759, 8
      %v777 = vpop.permute.xlu0 %776
      %vm778 = vcmask 64512
      %v779 = vsel %vm778, %v761, %v763
      %v780 = vsel %vm778, %v763, %v765
      %v781 = vsel %vm778, %v765, %v767
      %v782 = vsel %vm778, %v767, %v769
      %v783 = vsel %vm778, %v769, %v771
      %v784 = vsel %vm778, %v771, %v773
      %v785 = vsel %vm778, %v773, %v775
      %v786 = vsel %vm778, %v775, %v777
      %vm787 = vcmask 1041408
      %v790 = vsel %vm787, %v320, %v384
      %v793 = vsel %vm787, %v328, %v385
      %v796 = vsel %vm787, %v327, %v386
      %v799 = vsel %vm787, %v329, %v387
      %v802 = vsel %vm787, %v337, %v388
      %v805 = vsel %vm787, %v345, %v389
      %v808 = vsel %vm787, %v344, %v390
      %v811 = vsel %vm787, %v346, %v391
      %v814 = vsel %vm787, %v354, %v382
      %vm815 = vcmask 1043456
      %v817 = vsel %vm815, %v790, %v420
      %v819 = vsel %vm815, %v793, %v421
      %v821 = vsel %vm815, %v796, %v422
      %v823 = vsel %vm815, %v799, %v423
      %v825 = vsel %vm815, %v802, %v424
      %v827 = vsel %vm815, %v805, %v425
      %v829 = vsel %vm815, %v808, %v426
      %v831 = vsel %vm815, %v811, %v427
      %v833 = vsel %vm815, %v814, %v418
      %vm834 = vcmask 1045504
      %v836 = vsel %vm834, %v817, %v456
      %v838 = vsel %vm834, %v819, %v457
      %v840 = vsel %vm834, %v821, %v458
      %v842 = vsel %vm834, %v823, %v459
      %v844 = vsel %vm834, %v825, %v460
      %v846 = vsel %vm834, %v827, %v461
      %v848 = vsel %vm834, %v829, %v462
      %v850 = vsel %vm834, %v831, %v463
      %v852 = vsel %vm834, %v833, %v454
      %v855 = vsel %vm787, %v483, %v510
      %v858 = vsel %vm787, %v484, %v511
      %v861 = vsel %vm787, %v485, %v512
      %v864 = vsel %vm787, %v486, %v513
      %v867 = vsel %vm787, %v487, %v514
      %v870 = vsel %vm787, %v488, %v515
      %v873 = vsel %vm787, %v489, %v516
      %v876 = vsel %vm787, %v490, %v517
      %v879 = vsel %vm787, %v481, %v508
      %v881 = vsel %vm815, %v855, %v537
      %v883 = vsel %vm815, %v858, %v538
      %v885 = vsel %vm815, %v861, %v539
      %v887 = vsel %vm815, %v864, %v540
      %v889 = vsel %vm815, %v867, %v541
      %v891 = vsel %vm815, %v870, %v542
      %v893 = vsel %vm815, %v873, %v543
      %v895 = vsel %vm815, %v876, %v544
      %v897 = vsel %vm815, %v879, %v535
      %v899 = vsel %vm834, %v881, %v564
      %v901 = vsel %vm834, %v883, %v565
      %v903 = vsel %vm834, %v885, %v566
      %v905 = vsel %vm834, %v887, %v567
      %v907 = vsel %vm834, %v889, %v568
      %v909 = vsel %vm834, %v891, %v569
      %v911 = vsel %vm834, %v893, %v570
      %v913 = vsel %vm834, %v895, %v571
      %v915 = vsel %vm834, %v897, %v562
      %v918 = vsel %vm787, %v591, %v618
      %v921 = vsel %vm787, %v592, %v619
      %v924 = vsel %vm787, %v593, %v620
      %v927 = vsel %vm787, %v594, %v621
      %v930 = vsel %vm787, %v595, %v622
      %v933 = vsel %vm787, %v596, %v623
      %v936 = vsel %vm787, %v597, %v624
      %v939 = vsel %vm787, %v598, %v625
      %v942 = vsel %vm787, %v589, %v616
      %v944 = vsel %vm815, %v918, %v645
      %v946 = vsel %vm815, %v921, %v646
      %v948 = vsel %vm815, %v924, %v647
      %v950 = vsel %vm815, %v927, %v648
      %v952 = vsel %vm815, %v930, %v649
      %v954 = vsel %vm815, %v933, %v650
      %v956 = vsel %vm815, %v936, %v651
      %v958 = vsel %vm815, %v939, %v652
      %v960 = vsel %vm815, %v942, %v643
      %v962 = vsel %vm834, %v944, %v672
      %v964 = vsel %vm834, %v946, %v673
      %v966 = vsel %vm834, %v948, %v674
      %v968 = vsel %vm834, %v950, %v675
      %v970 = vsel %vm834, %v952, %v676
      %v972 = vsel %vm834, %v954, %v677
      %v974 = vsel %vm834, %v956, %v678
      %v976 = vsel %vm834, %v958, %v679
      %v978 = vsel %vm834, %v960, %v670
      %v981 = vsel %vm787, %v699, %v708
      %v984 = vsel %vm787, %v700, %v724
      %v987 = vsel %vm787, %v701, %v725
      %v990 = vsel %vm787, %v702, %v726
      %v993 = vsel %vm787, %v703, %v727
      %v996 = vsel %vm787, %v704, %v728
      %v999 = vsel %vm787, %v705, %v729
      %v1002 = vsel %vm787, %v706, %v730
      %v1005 = vsel %vm787, %v697, %v722
      %v1007 = vsel %vm815, %v981, %v733
      %v1009 = vsel %vm815, %v984, %v751
      %v1011 = vsel %vm815, %v987, %v752
      %v1013 = vsel %vm815, %v990, %v753
      %v1015 = vsel %vm815, %v993, %v754
      %v1017 = vsel %vm815, %v996, %v755
      %v1019 = vsel %vm815, %v999, %v756
      %v1021 = vsel %vm815, %v1002, %v757
      %v1023 = vsel %vm815, %v1005, %v758
      %v1025 = vsel %vm834, %v1007, %v761
      %v1027 = vsel %vm834, %v1009, %v779
      %v1029 = vsel %vm834, %v1011, %v780
      %v1031 = vsel %vm834, %v1013, %v781
      %v1033 = vsel %vm834, %v1015, %v782
      %v1035 = vsel %vm834, %v1017, %v783
      %v1037 = vsel %vm834, %v1019, %v784
      %v1039 = vsel %vm834, %v1021, %v785
      %v1041 = vsel %vm834, %v1023, %v786
      %v1042 = vrot.slane %v355, 6
      %1043 = vrot.lane.b32.xlu0 %v1042, 127
      %v1044 = vpop.permute.xlu0 %1043
      %v1045 = vsel %vm383, %v382, %v1044
      %1046 = vrot.lane.b32.xlu0 %v393, 49
      %v1047 = vpop.permute.xlu0 %1046
      %1048 = vrot.lane.b32.xlu0 %v394, 49
      %v1049 = vpop.permute.xlu0 %1048
      %1050 = vrot.lane.b32.xlu0 %v395, 49
      %v1051 = vpop.permute.xlu0 %1050
      %1052 = vrot.lane.b32.xlu0 %v396, 49
      %v1053 = vpop.permute.xlu0 %1052
      %1054 = vrot.lane.b32.xlu0 %v397, 49
      %v1055 = vpop.permute.xlu0 %1054
      %1056 = vrot.lane.b32.xlu0 %v398, 49
      %v1057 = vpop.permute.xlu0 %1056
      %1058 = vrot.lane.b32.xlu0 %v399, 49
      %v1059 = vpop.permute.xlu0 %1058
      %1060 = vrot.lane.b32.xlu0 %v400, 49
      %v1061 = vpop.permute.xlu0 %1060
      %1062 = vrot.lane.b32.xlu0 %v731, 49
      %v1063 = vpop.permute.xlu0 %1062
      %vm1064 = vcmask 400384
      %v1065 = vsel %vm1064, %v1047, %v1049
      %v1066 = vsel %vm1064, %v1049, %v1051
      %v1067 = vsel %vm1064, %v1051, %v1053
      %v1068 = vsel %vm1064, %v1053, %v1055
      %v1069 = vsel %vm1064, %v1055, %v1057
      %v1070 = vsel %vm1064, %v1057, %v1059
      %v1071 = vsel %vm1064, %v1059, %v1061
      %v1072 = vsel %vm1064, %v1061, %v1063
      %1073 = vrot.lane.b32.xlu0 %v429, 48
      %v1074 = vpop.permute.xlu0 %1073
      %1075 = vrot.lane.b32.xlu0 %v430, 48
      %v1076 = vpop.permute.xlu0 %1075
      %1077 = vrot.lane.b32.xlu0 %v431, 48
      %v1078 = vpop.permute.xlu0 %1077
      %1079 = vrot.lane.b32.xlu0 %v432, 48
      %v1080 = vpop.permute.xlu0 %1079
      %1081 = vrot.lane.b32.xlu0 %v433, 48
      %v1082 = vpop.permute.xlu0 %1081
      %1083 = vrot.lane.b32.xlu0 %v434, 48
      %v1084 = vpop.permute.xlu0 %1083
      %1085 = vrot.lane.b32.xlu0 %v435, 48
      %v1086 = vpop.permute.xlu0 %1085
      %1087 = vrot.lane.b32.xlu0 %v436, 48
      %v1088 = vpop.permute.xlu0 %1087
      %1089 = vrot.lane.b32.xlu0 %v759, 48
      %v1090 = vpop.permute.xlu0 %1089
      %vm1091 = vcmask 392192
      %v1092 = vsel %vm1091, %v1074, %v1076
      %v1093 = vsel %vm1091, %v1076, %v1078
      %v1094 = vsel %vm1091, %v1078, %v1080
      %v1095 = vsel %vm1091, %v1080, %v1082
      %v1096 = vsel %vm1091, %v1082, %v1084
      %v1097 = vsel %vm1091, %v1084, %v1086
      %v1098 = vsel %vm1091, %v1086, %v1088
      %v1099 = vsel %vm1091, %v1088, %v1090
      %1100 = vrot.lane.b32.xlu0 %v328, 47
      %v1101 = vpop.permute.xlu0 %1100
      %1102 = vrot.lane.b32.xlu0 %v327, 47
      %v1103 = vpop.permute.xlu0 %1102
      %1104 = vrot.lane.b32.xlu0 %v329, 47
      %v1105 = vpop.permute.xlu0 %1104
      %1106 = vrot.lane.b32.xlu0 %v337, 47
      %v1107 = vpop.permute.xlu0 %1106
      %1108 = vrot.lane.b32.xlu0 %v345, 47
      %v1109 = vpop.permute.xlu0 %1108
      %1110 = vrot.lane.b32.xlu0 %v344, 47
      %v1111 = vpop.permute.xlu0 %1110
      %1112 = vrot.lane.b32.xlu0 %v346, 47
      %v1113 = vpop.permute.xlu0 %1112
      %1114 = vrot.lane.b32.xlu0 %v354, 47
      %v1115 = vpop.permute.xlu0 %1114
      %1116 = vrot.lane.b32.xlu0 %v355, 47
      %v1117 = vpop.permute.xlu0 %1116
      %vm1118 = vcmask 384000
      %v1119 = vsel %vm1118, %v1101, %v1103
      %v1120 = vsel %vm1118, %v1103, %v1105
      %v1121 = vsel %vm1118, %v1105, %v1107
      %v1122 = vsel %vm1118, %v1107, %v1109
      %v1123 = vsel %vm1118, %v1109, %v1111
      %v1124 = vsel %vm1118, %v1111, %v1113
      %v1125 = vsel %vm1118, %v1113, %v1115
      %v1126 = vsel %vm1118, %v1115, %v1117
      %1127 = vrot.lane.b32.xlu0 %v357, 39
      %v1128 = vpop.permute.xlu0 %1127
      %1129 = vrot.lane.b32.xlu0 %v358, 39
      %v1130 = vpop.permute.xlu0 %1129
      %1131 = vrot.lane.b32.xlu0 %v359, 39
      %v1132 = vpop.permute.xlu0 %1131
      %1133 = vrot.lane.b32.xlu0 %v360, 39
      %v1134 = vpop.permute.xlu0 %1133
      %1135 = vrot.lane.b32.xlu0 %v361, 39
      %v1136 = vpop.permute.xlu0 %1135
      %1137 = vrot.lane.b32.xlu0 %v362, 39
      %v1138 = vpop.permute.xlu0 %1137
      %1139 = vrot.lane.b32.xlu0 %v363, 39
      %v1140 = vpop.permute.xlu0 %1139
      %1141 = vrot.lane.b32.xlu0 %v364, 39
      %v1142 = vpop.permute.xlu0 %1141
      %1143 = vrot.lane.b32.xlu0 %v1042, 39
      %v1144 = vpop.permute.xlu0 %1143
      %vm1145 = vcmask 318464
      %v1146 = vsel %vm1145, %v1128, %v1130
      %v1147 = vsel %vm1145, %v1130, %v1132
      %v1148 = vsel %vm1145, %v1132, %v1134
      %v1149 = vsel %vm1145, %v1134, %v1136
      %v1150 = vsel %vm1145, %v1136, %v1138
      %v1151 = vsel %vm1145, %v1138, %v1140
      %v1152 = vsel %vm1145, %v1140, %v1142
      %v1153 = vsel %vm1145, %v1142, %v1144
      %1154 = vrot.lane.b32.xlu0 %v393, 38
      %v1155 = vpop.permute.xlu0 %1154
      %1156 = vrot.lane.b32.xlu0 %v394, 38
      %v1157 = vpop.permute.xlu0 %1156
      %1158 = vrot.lane.b32.xlu0 %v395, 38
      %v1159 = vpop.permute.xlu0 %1158
      %1160 = vrot.lane.b32.xlu0 %v396, 38
      %v1161 = vpop.permute.xlu0 %1160
      %1162 = vrot.lane.b32.xlu0 %v397, 38
      %v1163 = vpop.permute.xlu0 %1162
      %1164 = vrot.lane.b32.xlu0 %v398, 38
      %v1165 = vpop.permute.xlu0 %1164
      %1166 = vrot.lane.b32.xlu0 %v399, 38
      %v1167 = vpop.permute.xlu0 %1166
      %1168 = vrot.lane.b32.xlu0 %v400, 38
      %v1169 = vpop.permute.xlu0 %1168
      %1170 = vrot.lane.b32.xlu0 %v731, 38
      %v1171 = vpop.permute.xlu0 %1170
      %vm1172 = vcmask 310272
      %v1173 = vsel %vm1172, %v1155, %v1157
      %v1174 = vsel %vm1172, %v1157, %v1159
      %v1175 = vsel %vm1172, %v1159, %v1161
      %v1176 = vsel %vm1172, %v1161, %v1163
      %v1177 = vsel %vm1172, %v1163, %v1165
      %v1178 = vsel %vm1172, %v1165, %v1167
      %v1179 = vsel %vm1172, %v1167, %v1169
      %v1180 = vsel %vm1172, %v1169, %v1171
      %1181 = vrot.lane.b32.xlu0 %v429, 37
      %v1182 = vpop.permute.xlu0 %1181
      %1183 = vrot.lane.b32.xlu0 %v430, 37
      %v1184 = vpop.permute.xlu0 %1183
      %1185 = vrot.lane.b32.xlu0 %v431, 37
      %v1186 = vpop.permute.xlu0 %1185
      %1187 = vrot.lane.b32.xlu0 %v432, 37
      %v1188 = vpop.permute.xlu0 %1187
      %1189 = vrot.lane.b32.xlu0 %v433, 37
      %v1190 = vpop.permute.xlu0 %1189
      %1191 = vrot.lane.b32.xlu0 %v434, 37
      %v1192 = vpop.permute.xlu0 %1191
      %1193 = vrot.lane.b32.xlu0 %v435, 37
      %v1194 = vpop.permute.xlu0 %1193
      %1195 = vrot.lane.b32.xlu0 %v436, 37
      %v1196 = vpop.permute.xlu0 %1195
      %1197 = vrot.lane.b32.xlu0 %v759, 37
      %v1198 = vpop.permute.xlu0 %1197
      %vm1199 = vcmask 302080
      %v1200 = vsel %vm1199, %v1182, %v1184
      %v1201 = vsel %vm1199, %v1184, %v1186
      %v1202 = vsel %vm1199, %v1186, %v1188
      %v1203 = vsel %vm1199, %v1188, %v1190
      %v1204 = vsel %vm1199, %v1190, %v1192
      %v1205 = vsel %vm1199, %v1192, %v1194
      %v1206 = vsel %vm1199, %v1194, %v1196
      %v1207 = vsel %vm1199, %v1196, %v1198
      %1208 = vrot.lane.b32.xlu0 %v328, 29
      %v1209 = vpop.permute.xlu0 %1208
      %1210 = vrot.lane.b32.xlu0 %v327, 29
      %v1211 = vpop.permute.xlu0 %1210
      %1212 = vrot.lane.b32.xlu0 %v329, 29
      %v1213 = vpop.permute.xlu0 %1212
      %1214 = vrot.lane.b32.xlu0 %v337, 29
      %v1215 = vpop.permute.xlu0 %1214
      %1216 = vrot.lane.b32.xlu0 %v345, 29
      %v1217 = vpop.permute.xlu0 %1216
      %1218 = vrot.lane.b32.xlu0 %v344, 29
      %v1219 = vpop.permute.xlu0 %1218
      %1220 = vrot.lane.b32.xlu0 %v346, 29
      %v1221 = vpop.permute.xlu0 %1220
      %1222 = vrot.lane.b32.xlu0 %v354, 29
      %v1223 = vpop.permute.xlu0 %1222
      %1224 = vrot.lane.b32.xlu0 %v355, 29
      %v1225 = vpop.permute.xlu0 %1224
      %vm1226 = vcmask 236544
      %v1227 = vsel %vm1226, %v1209, %v1211
      %v1228 = vsel %vm1226, %v1211, %v1213
      %v1229 = vsel %vm1226, %v1213, %v1215
      %v1230 = vsel %vm1226, %v1215, %v1217
      %v1231 = vsel %vm1226, %v1217, %v1219
      %v1232 = vsel %vm1226, %v1219, %v1221
      %v1233 = vsel %vm1226, %v1221, %v1223
      %v1234 = vsel %vm1226, %v1223, %v1225
      %1235 = vrot.lane.b32.xlu0 %v1042, 28
      %v1236 = vpop.permute.xlu0 %1235
      %v1237 = vsel %vm617, %v616, %v1236
      %1238 = vrot.lane.b32.xlu0 %v731, 27
      %v1239 = vpop.permute.xlu0 %1238
      %v1240 = vsel %vm644, %v643, %v1239
      %v1242 = vsel %vm787, %v354, %v1045
      %v1245 = vsel %vm787, %v355, %v1044
      %v1247 = vsel %vm815, %v793, %v1065
      %v1249 = vsel %vm815, %v796, %v1066
      %v1251 = vsel %vm815, %v799, %v1067
      %v1253 = vsel %vm815, %v802, %v1068
      %v1255 = vsel %vm815, %v805, %v1069
      %v1257 = vsel %vm815, %v808, %v1070
      %v1259 = vsel %vm815, %v811, %v1071
      %v1261 = vsel %vm815, %v1242, %v1072
      %v1263 = vsel %vm815, %v1245, %v1063
      %v1265 = vsel %vm834, %v1247, %v1092
      %v1267 = vsel %vm834, %v1249, %v1093
      %v1269 = vsel %vm834, %v1251, %v1094
      %v1271 = vsel %vm834, %v1253, %v1095
      %v1273 = vsel %vm834, %v1255, %v1096
      %v1275 = vsel %vm834, %v1257, %v1097
      %v1277 = vsel %vm834, %v1259, %v1098
      %v1279 = vsel %vm834, %v1261, %v1099
      %v1281 = vsel %vm834, %v1263, %v1090
      %v1284 = vsel %vm787, %v1119, %v1146
      %v1287 = vsel %vm787, %v1120, %v1147
      %v1290 = vsel %vm787, %v1121, %v1148
      %v1293 = vsel %vm787, %v1122, %v1149
      %v1296 = vsel %vm787, %v1123, %v1150
      %v1299 = vsel %vm787, %v1124, %v1151
      %v1302 = vsel %vm787, %v1125, %v1152
      %v1305 = vsel %vm787, %v1126, %v1153
      %v1308 = vsel %vm787, %v1117, %v1144
      %v1310 = vsel %vm815, %v1284, %v1173
      %v1312 = vsel %vm815, %v1287, %v1174
      %v1314 = vsel %vm815, %v1290, %v1175
      %v1316 = vsel %vm815, %v1293, %v1176
      %v1318 = vsel %vm815, %v1296, %v1177
      %v1320 = vsel %vm815, %v1299, %v1178
      %v1322 = vsel %vm815, %v1302, %v1179
      %v1324 = vsel %vm815, %v1305, %v1180
      %v1326 = vsel %vm815, %v1308, %v1171
      %v1328 = vsel %vm834, %v1310, %v1200
      %v1330 = vsel %vm834, %v1312, %v1201
      %v1332 = vsel %vm834, %v1314, %v1202
      %v1334 = vsel %vm834, %v1316, %v1203
      %v1336 = vsel %vm834, %v1318, %v1204
      %v1338 = vsel %vm834, %v1320, %v1205
      %v1340 = vsel %vm834, %v1322, %v1206
      %v1342 = vsel %vm834, %v1324, %v1207
      %v1344 = vsel %vm834, %v1326, %v1198
      %v1346 = vsel %vm787, %v1227, %v619
      %v1348 = vsel %vm787, %v1228, %v620
      %v1350 = vsel %vm787, %v1229, %v621
      %v1352 = vsel %vm787, %v1230, %v622
      %v1354 = vsel %vm787, %v1231, %v623
      %v1356 = vsel %vm787, %v1232, %v624
      %v1358 = vsel %vm787, %v1233, %v625
      %v1361 = vsel %vm787, %v1234, %v1237
      %v1364 = vsel %vm787, %v1225, %v1236
      %v1365 = vsel %vm815, %v1346, %v646
      %v1366 = vsel %vm815, %v1348, %v647
      %v1367 = vsel %vm815, %v1350, %v648
      %v1368 = vsel %vm815, %v1352, %v649
      %v1369 = vsel %vm815, %v1354, %v650
      %v1370 = vsel %vm815, %v1356, %v651
      %v1371 = vsel %vm815, %v1358, %v652
      %v1373 = vsel %vm815, %v1361, %v1240
      %v1375 = vsel %vm815, %v1364, %v1239
      %1403 = vrot.lane.b32.xlu0 %v1265, 7
      %v1404 = vpop.permute.xlu0 %1403
      %1405 = vrot.lane.b32.xlu0 %v1267, 7
      %v1406 = vpop.permute.xlu0 %1405
      %1407 = vrot.lane.b32.xlu0 %v1269, 7
      %v1408 = vpop.permute.xlu0 %1407
      %1409 = vrot.lane.b32.xlu0 %v1271, 7
      %v1410 = vpop.permute.xlu0 %1409
      %1411 = vrot.lane.b32.xlu0 %v1273, 7
      %v1412 = vpop.permute.xlu0 %1411
      %1413 = vrot.lane.b32.xlu0 %v1275, 7
      %v1414 = vpop.permute.xlu0 %1413
      %1415 = vrot.lane.b32.xlu0 %v1277, 7
      %v1416 = vpop.permute.xlu0 %1415
      %1417 = vrot.lane.b32.xlu0 %v1279, 7
      %v1418 = vpop.permute.xlu0 %1417
      %1419 = vrot.lane.b32.xlu0 %v1281, 7
      %v1420 = vpop.permute.xlu0 %1419
      %1421 = vrot.lane.b32.xlu0 %v1328, 7
      %v1422 = vpop.permute.xlu0 %1421
      %1423 = vrot.lane.b32.xlu0 %v1330, 7
      %v1424 = vpop.permute.xlu0 %1423
      %1425 = vrot.lane.b32.xlu0 %v1332, 7
      %v1426 = vpop.permute.xlu0 %1425
      %1427 = vrot.lane.b32.xlu0 %v1334, 7
      %v1428 = vpop.permute.xlu0 %1427
      %1429 = vrot.lane.b32.xlu0 %v1336, 7
      %v1430 = vpop.permute.xlu0 %1429
      %1431 = vrot.lane.b32.xlu0 %v1338, 7
      %v1432 = vpop.permute.xlu0 %1431
      %1433 = vrot.lane.b32.xlu0 %v1340, 7
      %v1434 = vpop.permute.xlu0 %1433
      %1435 = vrot.lane.b32.xlu0 %v1342, 7
      %v1436 = vpop.permute.xlu0 %1435
      %1437 = vrot.lane.b32.xlu0 %v1344, 7
      %v1438 = vpop.permute.xlu0 %1437
      %1439 = vrot.lane.b32.xlu0 %v1365, 7
      %v1440 = vpop.permute.xlu0 %1439
      %1441 = vrot.lane.b32.xlu0 %v1366, 7
      %v1442 = vpop.permute.xlu0 %1441
      %1443 = vrot.lane.b32.xlu0 %v1367, 7
      %v1444 = vpop.permute.xlu0 %1443
      %1445 = vrot.lane.b32.xlu0 %v1368, 7
      %v1446 = vpop.permute.xlu0 %1445
      %1447 = vrot.lane.b32.xlu0 %v1369, 7
      %v1448 = vpop.permute.xlu0 %1447
      %1449 = vrot.lane.b32.xlu0 %v1370, 7
      %v1450 = vpop.permute.xlu0 %1449
      %1451 = vrot.lane.b32.xlu0 %v1371, 7
      %v1452 = vpop.permute.xlu0 %1451
      %1453 = vrot.lane.b32.xlu0 %v1373, 7
      %v1454 = vpop.permute.xlu0 %1453
      %1455 = vrot.lane.b32.xlu0 %v1375, 7
      %v1456 = vpop.permute.xlu0 %1455
      %vm1457 = vcmask 56320
      %v1458 = vsel %vm1457, %v1404, %v1406
      %v1459 = vsel %vm1457, %v1406, %v1408
      %v1460 = vsel %vm1457, %v1408, %v1410
      %v1461 = vsel %vm1457, %v1410, %v1412
      %v1462 = vsel %vm1457, %v1412, %v1414
      %v1463 = vsel %vm1457, %v1414, %v1416
      %v1464 = vsel %vm1457, %v1416, %v1418
      %v1465 = vsel %vm1457, %v1418, %v1420
      %v1466 = vsel %vm1457, %v1422, %v1424
      %v1467 = vsel %vm1457, %v1424, %v1426
      %v1468 = vsel %vm1457, %v1426, %v1428
      %v1469 = vsel %vm1457, %v1428, %v1430
      %v1470 = vsel %vm1457, %v1430, %v1432
      %v1471 = vsel %vm1457, %v1432, %v1434
      %v1472 = vsel %vm1457, %v1434, %v1436
      %v1473 = vsel %vm1457, %v1436, %v1438
      %v1474 = vsel %vm1457, %v1440, %v1442
      %v1475 = vsel %vm1457, %v1442, %v1444
      %v1476 = vsel %vm1457, %v1444, %v1446
      %v1477 = vsel %vm1457, %v1446, %v1448
      %v1478 = vsel %vm1457, %v1448, %v1450
      %v1479 = vsel %vm1457, %v1450, %v1452
      %v1480 = vsel %vm1457, %v1452, %v1454
      %v1481 = vsel %vm1457, %v1454, %v1456
      %v1482 = vld [vmem:[%s2] sm:$0xf]
      %v1483 = vld [vmem:[%s3] sm:$0xff]
      %1485 = vset.pattern.permute.xlu0 0
      %1486 = vperm.xlu0 %1485, %v1483
      %v1487 = vpop.permute.xlu0 %1486
      %1525 = vrot.lane.b32.xlu0 %v836, 111
      %v1526 = vpop.permute.xlu0 %1525
      %1527 = vrot.lane.b32.xlu0 %v838, 111
      %v1528 = vpop.permute.xlu0 %1527
      %1529 = vrot.lane.b32.xlu0 %v840, 111
      %v1530 = vpop.permute.xlu0 %1529
      %1531 = vrot.lane.b32.xlu0 %v842, 111
      %v1532 = vpop.permute.xlu0 %1531
      %1533 = vrot.lane.b32.xlu0 %v844, 111
      %v1534 = vpop.permute.xlu0 %1533
      %1535 = vrot.lane.b32.xlu0 %v846, 111
      %v1536 = vpop.permute.xlu0 %1535
      %1537 = vrot.lane.b32.xlu0 %v848, 111
      %v1538 = vpop.permute.xlu0 %1537
      %1539 = vrot.lane.b32.xlu0 %v850, 111
      %v1540 = vpop.permute.xlu0 %1539
      %1541 = vrot.lane.b32.xlu0 %v852, 111
      %v1542 = vpop.permute.xlu0 %1541
      %1543 = vrot.lane.b32.xlu0 %v899, 111
      %v1544 = vpop.permute.xlu0 %1543
      %1545 = vrot.lane.b32.xlu0 %v901, 111
      %v1546 = vpop.permute.xlu0 %1545
      %1547 = vrot.lane.b32.xlu0 %v903, 111
      %v1548 = vpop.permute.xlu0 %1547
      %1549 = vrot.lane.b32.xlu0 %v905, 111
      %v1550 = vpop.permute.xlu0 %1549
      %1551 = vrot.lane.b32.xlu0 %v907, 111
      %v1552 = vpop.permute.xlu0 %1551
      %1553 = vrot.lane.b32.xlu0 %v909, 111
      %v1554 = vpop.permute.xlu0 %1553
      %1555 = vrot.lane.b32.xlu0 %v911, 111
      %v1556 = vpop.permute.xlu0 %1555
      %1557 = vrot.lane.b32.xlu0 %v913, 111
      %v1558 = vpop.permute.xlu0 %1557
      %1559 = vrot.lane.b32.xlu0 %v915, 111
      %v1560 = vpop.permute.xlu0 %1559
      %1561 = vrot.lane.b32.xlu0 %v962, 111
      %v1562 = vpop.permute.xlu0 %1561
      %1563 = vrot.lane.b32.xlu0 %v964, 111
      %v1564 = vpop.permute.xlu0 %1563
      %1565 = vrot.lane.b32.xlu0 %v966, 111
      %v1566 = vpop.permute.xlu0 %1565
      %1567 = vrot.lane.b32.xlu0 %v968, 111
      %v1568 = vpop.permute.xlu0 %1567
      %1569 = vrot.lane.b32.xlu0 %v970, 111
      %v1570 = vpop.permute.xlu0 %1569
      %1571 = vrot.lane.b32.xlu0 %v972, 111
      %v1572 = vpop.permute.xlu0 %1571
      %1573 = vrot.lane.b32.xlu0 %v974, 111
      %v1574 = vpop.permute.xlu0 %1573
      %1575 = vrot.lane.b32.xlu0 %v976, 111
      %v1576 = vpop.permute.xlu0 %1575
      %1577 = vrot.lane.b32.xlu0 %v978, 111
      %v1578 = vpop.permute.xlu0 %1577
      %1579 = vrot.lane.b32.xlu0 %v1025, 111
      %v1580 = vpop.permute.xlu0 %1579
      %1581 = vrot.lane.b32.xlu0 %v1027, 111
      %v1582 = vpop.permute.xlu0 %1581
      %1583 = vrot.lane.b32.xlu0 %v1029, 111
      %v1584 = vpop.permute.xlu0 %1583
      %1585 = vrot.lane.b32.xlu0 %v1031, 111
      %v1586 = vpop.permute.xlu0 %1585
      %1587 = vrot.lane.b32.xlu0 %v1033, 111
      %v1588 = vpop.permute.xlu0 %1587
      %1589 = vrot.lane.b32.xlu0 %v1035, 111
      %v1590 = vpop.permute.xlu0 %1589
      %1591 = vrot.lane.b32.xlu0 %v1037, 111
      %v1592 = vpop.permute.xlu0 %1591
      %1593 = vrot.lane.b32.xlu0 %v1039, 111
      %v1594 = vpop.permute.xlu0 %1593
      %1595 = vrot.lane.b32.xlu0 %v1041, 111
      %v1596 = vpop.permute.xlu0 %1595
      %1597 = vrot.lane.b32.xlu0 %v1404, 111
      %v1598 = vpop.permute.xlu0 %1597
      %1599 = vrot.lane.b32.xlu0 %v1458, 111
      %v1600 = vpop.permute.xlu0 %1599
      %1601 = vrot.lane.b32.xlu0 %v1459, 111
      %v1602 = vpop.permute.xlu0 %1601
      %1603 = vrot.lane.b32.xlu0 %v1460, 111
      %v1604 = vpop.permute.xlu0 %1603
      %1605 = vrot.lane.b32.xlu0 %v1461, 111
      %v1606 = vpop.permute.xlu0 %1605
      %1607 = vrot.lane.b32.xlu0 %v1462, 111
      %v1608 = vpop.permute.xlu0 %1607
      %1609 = vrot.lane.b32.xlu0 %v1463, 111
      %v1610 = vpop.permute.xlu0 %1609
      %1611 = vrot.lane.b32.xlu0 %v1464, 111
      %v1612 = vpop.permute.xlu0 %1611
      %1613 = vrot.lane.b32.xlu0 %v1465, 111
      %v1614 = vpop.permute.xlu0 %1613
      %1615 = vrot.lane.b32.xlu0 %v1422, 111
      %v1616 = vpop.permute.xlu0 %1615
      %1617 = vrot.lane.b32.xlu0 %v1466, 111
      %v1618 = vpop.permute.xlu0 %1617
      %1619 = vrot.lane.b32.xlu0 %v1467, 111
      %v1620 = vpop.permute.xlu0 %1619
      %1621 = vrot.lane.b32.xlu0 %v1468, 111
      %v1622 = vpop.permute.xlu0 %1621
      %1623 = vrot.lane.b32.xlu0 %v1469, 111
      %v1624 = vpop.permute.xlu0 %1623
      %1625 = vrot.lane.b32.xlu0 %v1470, 111
      %v1626 = vpop.permute.xlu0 %1625
      %1627 = vrot.lane.b32.xlu0 %v1471, 111
      %v1628 = vpop.permute.xlu0 %1627
      %1629 = vrot.lane.b32.xlu0 %v1472, 111
      %v1630 = vpop.permute.xlu0 %1629
      %1631 = vrot.lane.b32.xlu0 %v1473, 111
      %v1632 = vpop.permute.xlu0 %1631
      %1633 = vrot.lane.b32.xlu0 %v1440, 111
      %v1634 = vpop.permute.xlu0 %1633
      %1635 = vrot.lane.b32.xlu0 %v1474, 111
      %v1636 = vpop.permute.xlu0 %1635
      %1637 = vrot.lane.b32.xlu0 %v1475, 111
      %v1638 = vpop.permute.xlu0 %1637
      %1639 = vrot.lane.b32.xlu0 %v1476, 111
      %v1640 = vpop.permute.xlu0 %1639
      %1641 = vrot.lane.b32.xlu0 %v1477, 111
      %v1642 = vpop.permute.xlu0 %1641
      %1643 = vrot.lane.b32.xlu0 %v1478, 111
      %v1644 = vpop.permute.xlu0 %1643
      %1645 = vrot.lane.b32.xlu0 %v1479, 111
      %v1646 = vpop.permute.xlu0 %1645
      %1647 = vrot.lane.b32.xlu0 %v1480, 111
      %v1648 = vpop.permute.xlu0 %1647
      %1649 = vrot.lane.b32.xlu0 %v1481, 111
      %v1650 = vpop.permute.xlu0 %1649
      %vm1651 = vcmask 908288
      %v1652 = vsel %vm1651, %v1526, %v1528
      %v1653 = vsel %vm1651, %v1528, %v1530
      %v1654 = vsel %vm1651, %v1530, %v1532
      %v1655 = vsel %vm1651, %v1532, %v1534
      %v1656 = vsel %vm1651, %v1534, %v1536
      %v1657 = vsel %vm1651, %v1536, %v1538
      %v1658 = vsel %vm1651, %v1538, %v1540
      %v1659 = vsel %vm1651, %v1540, %v1542
      %v1660 = vsel %vm1651, %v1544, %v1546
      %v1661 = vsel %vm1651, %v1546, %v1548
      %v1662 = vsel %vm1651, %v1548, %v1550
      %v1663 = vsel %vm1651, %v1550, %v1552
      %v1664 = vsel %vm1651, %v1552, %v1554
      %v1665 = vsel %vm1651, %v1554, %v1556
      %v1666 = vsel %vm1651, %v1556, %v1558
      %v1667 = vsel %vm1651, %v1558, %v1560
      %v1668 = vsel %vm1651, %v1562, %v1564
      %v1669 = vsel %vm1651, %v1564, %v1566
      %v1670 = vsel %vm1651, %v1566, %v1568
      %v1671 = vsel %vm1651, %v1568, %v1570
      %v1672 = vsel %vm1651, %v1570, %v1572
      %v1673 = vsel %vm1651, %v1572, %v1574
      %v1674 = vsel %vm1651, %v1574, %v1576
      %v1675 = vsel %vm1651, %v1576, %v1578
      %v1676 = vsel %vm1651, %v1580, %v1582
      %v1677 = vsel %vm1651, %v1582, %v1584
      %v1678 = vsel %vm1651, %v1584, %v1586
      %v1679 = vsel %vm1651, %v1586, %v1588
      %v1680 = vsel %vm1651, %v1588, %v1590
      %v1681 = vsel %vm1651, %v1590, %v1592
      %v1682 = vsel %vm1651, %v1592, %v1594
      %v1683 = vsel %vm1651, %v1594, %v1596
      %v1684 = vsel %vm1651, %v1598, %v1600
      %v1685 = vsel %vm1651, %v1600, %v1602
      %v1686 = vsel %vm1651, %v1602, %v1604
      %v1687 = vsel %vm1651, %v1604, %v1606
      %v1688 = vsel %vm1651, %v1606, %v1608
      %v1689 = vsel %vm1651, %v1608, %v1610
      %v1690 = vsel %vm1651, %v1610, %v1612
      %v1691 = vsel %vm1651, %v1612, %v1614
      %v1692 = vsel %vm1651, %v1616, %v1618
      %v1693 = vsel %vm1651, %v1618, %v1620
      %v1694 = vsel %vm1651, %v1620, %v1622
      %v1695 = vsel %vm1651, %v1622, %v1624
      %v1696 = vsel %vm1651, %v1624, %v1626
      %v1697 = vsel %vm1651, %v1626, %v1628
      %v1698 = vsel %vm1651, %v1628, %v1630
      %v1699 = vsel %vm1651, %v1630, %v1632
      %v1700 = vsel %vm1651, %v1634, %v1636
      %v1701 = vsel %vm1651, %v1636, %v1638
      %v1702 = vsel %vm1651, %v1638, %v1640
      %v1703 = vsel %vm1651, %v1640, %v1642
      %v1704 = vsel %vm1651, %v1642, %v1644
      %v1705 = vsel %vm1651, %v1644, %v1646
      %v1706 = vsel %vm1651, %v1646, %v1648
      %v1707 = vsel %vm1651, %v1648, %v1650
      %vm1756 = vcmask 883712
      %v1758 = vsel %vm1756, %v1482, 0
      %v1761 = vsel %vm834, %v1700, 0
      %v1764 = vsel %vm834, %v1701, 0
      %v1767 = vsel %vm834, %v1702, 0
      %v1770 = vsel %vm834, %v1703, 0
      %v1773 = vsel %vm834, %v1704, 0
      %v1776 = vsel %vm834, %v1705, 0
      %v1779 = vsel %vm834, %v1706, 0
      %v1782 = vsel %vm834, %v1707, 0
      %1784 = vmatprep.subr.bf16.mxu0 %v1653
      %1785 = vmatpush1.bf16.msra.mxu0 %v1652
      %1786 = vmatprep.subr.bf16.mxu0 %v1661
      %1787 = vmatpush1.bf16.msra.mxu0 %v1660
      %1788 = vmatprep.subr.bf16.mxu0 %v1669
      %1789 = vmatpush1.bf16.msra.mxu0 %v1668
      %1790 = vmatprep.subr.bf16.mxu0 %v1677
      %1791 = vmatpush1.bf16.msra.mxu0 %v1676
      %1792 = vmatprep.subr.bf16.mxu0 %v1685
      %1793 = vmatpush1.bf16.msra.mxu0 %v1684
      %1794 = vmatprep.subr.bf16.mxu0 %v1693
      %1795 = vmatpush1.bf16.msra.mxu0 %v1692
      %1796 = vmatprep.subr.bf16.mxu0 %v1764
      %1797 = vmatpush1.bf16.msra.mxu0 %v1761
      %1798 = vmatprep.subr.bf16.mxu0 0
      %1799 = vmatpush1.bf16.msra.mxu0 0
      %1800 = vmatprep.subr.bf16.mxu0 0
      %1801 = vmatpush1.bf16.msra.mxu0 0
      %1802 = vmatprep.subr.bf16.mxu0 0
      %1803 = vmatpush1.bf16.msra.mxu0 0
      %1804 = vmatprep.subr.bf16.mxu0 0
      %1805 = vmatpush1.bf16.msra.mxu0 0
      %1806 = vmatprep.subr.bf16.mxu0 0
      %1807 = vmatpush1.bf16.msra.mxu0 0
      %1808 = vmatprep.subr.bf16.mxu0 0
      %1809 = vmatpush1.bf16.msra.mxu0 0
      %1810 = vmatprep.subr.bf16.mxu0 0
      %1811 = vmatpush1.bf16.msra.mxu0 0
      %1812 = vmatprep.subr.bf16.mxu0 0
      %1813 = vmatpush1.bf16.msra.mxu0 0
      %1814 = vmatprep.subr.bf16.mxu0 0
      %1815 = vmatpush1.bf16.msra.mxu0 0
      %1816 = vmatprep.mubr.bf16.mxu0 0
      %1817 = vmatmul.mubr.bf16.gmra.mrb[0].mxu0 %v1758
      %v1818 = vpop.f32.mrb[0].mxu0
      %v1819 = vadd.f32 %v1487, %v1818
      %v1820 = vpop.f32.mrb[0].mxu0
      %v1821 = vadd.f32 %v1487, %v1820
      %v1822 = vpop.f32.mrb[0].mxu0
      %v1823 = vpop.f32.mrb[0].mxu0
      %1824 = vdwg.mxu0
      %1825 = vmatprep.subr.bf16.mxu0 %v1655
      %1826 = vmatpush1.bf16.msra.mxu0 %v1654
      %1827 = vmatprep.subr.bf16.mxu0 %v1663
      %1828 = vmatpush1.bf16.msra.mxu0 %v1662
      %1829 = vmatprep.subr.bf16.mxu0 %v1671
      %1830 = vmatpush1.bf16.msra.mxu0 %v1670
      %1831 = vmatprep.subr.bf16.mxu0 %v1679
      %1832 = vmatpush1.bf16.msra.mxu0 %v1678
      %1833 = vmatprep.subr.bf16.mxu0 %v1687
      %1834 = vmatpush1.bf16.msra.mxu0 %v1686
      %1835 = vmatprep.subr.bf16.mxu0 %v1695
      %1836 = vmatpush1.bf16.msra.mxu0 %v1694
      %1837 = vmatprep.subr.bf16.mxu0 %v1770
      %1838 = vmatpush1.bf16.msra.mxu0 %v1767
      %1839 = vmatprep.subr.bf16.mxu0 0
      %1840 = vmatpush1.bf16.msra.mxu0 0
      %1841 = vmatprep.subr.bf16.mxu0 0
      %1842 = vmatpush1.bf16.msra.mxu0 0
      %1843 = vmatprep.subr.bf16.mxu0 0
      %1844 = vmatpush1.bf16.msra.mxu0 0
      %1845 = vmatprep.subr.bf16.mxu0 0
      %1846 = vmatpush1.bf16.msra.mxu0 0
      %1847 = vmatprep.subr.bf16.mxu0 0
      %1848 = vmatpush1.bf16.msra.mxu0 0
      %1849 = vmatprep.subr.bf16.mxu0 0
      %1850 = vmatpush1.bf16.msra.mxu0 0
      %1851 = vmatprep.subr.bf16.mxu0 0
      %1852 = vmatpush1.bf16.msra.mxu0 0
      %1853 = vmatprep.subr.bf16.mxu0 0
      %1854 = vmatpush1.bf16.msra.mxu0 0
      %1855 = vmatprep.subr.bf16.mxu0 0
      %1856 = vmatpush1.bf16.msra.mxu0 0
      %1857 = vmatprep.mubr.bf16.mxu0 0
      %1858 = vmatmul.mubr.bf16.gmra.mrb[0].mxu0 %v1758
      %v1859 = vpop.f32.mrb[0].mxu0
      %v1860 = vadd.f32 %v1487, %v1859
      %v1861 = vpop.f32.mrb[0].mxu0
      %v1862 = vadd.f32 %v1487, %v1861
      %v1863 = vpop.f32.mrb[0].mxu0
      %v1864 = vpop.f32.mrb[0].mxu0
      %1865 = vdwg.mxu0
      %1866 = vmatprep.subr.bf16.mxu0 %v1657
      %1867 = vmatpush1.bf16.msra.mxu0 %v1656
      %1868 = vmatprep.subr.bf16.mxu0 %v1665
      %1869 = vmatpush1.bf16.msra.mxu0 %v1664
      %1870 = vmatprep.subr.bf16.mxu0 %v1673
      %1871 = vmatpush1.bf16.msra.mxu0 %v1672
      %1872 = vmatprep.subr.bf16.mxu0 %v1681
      %1873 = vmatpush1.bf16.msra.mxu0 %v1680
      %1874 = vmatprep.subr.bf16.mxu0 %v1689
      %1875 = vmatpush1.bf16.msra.mxu0 %v1688
      %1876 = vmatprep.subr.bf16.mxu0 %v1697
      %1877 = vmatpush1.bf16.msra.mxu0 %v1696
      %1878 = vmatprep.subr.bf16.mxu0 %v1776
      %1879 = vmatpush1.bf16.msra.mxu0 %v1773
      %1880 = vmatprep.subr.bf16.mxu0 0
      %1881 = vmatpush1.bf16.msra.mxu0 0
      %1882 = vmatprep.subr.bf16.mxu0 0
      %1883 = vmatpush1.bf16.msra.mxu0 0
      %1884 = vmatprep.subr.bf16.mxu0 0
      %1885 = vmatpush1.bf16.msra.mxu0 0
      %1886 = vmatprep.subr.bf16.mxu0 0
      %1887 = vmatpush1.bf16.msra.mxu0 0
      %1888 = vmatprep.subr.bf16.mxu0 0
      %1889 = vmatpush1.bf16.msra.mxu0 0
      %1890 = vmatprep.subr.bf16.mxu0 0
      %1891 = vmatpush1.bf16.msra.mxu0 0
      %1892 = vmatprep.subr.bf16.mxu0 0
      %1893 = vmatpush1.bf16.msra.mxu0 0
      %1894 = vmatprep.subr.bf16.mxu0 0
      %1895 = vmatpush1.bf16.msra.mxu0 0
      %1896 = vmatprep.subr.bf16.mxu0 0
      %1897 = vmatpush1.bf16.msra.mxu0 0
      %1898 = vmatprep.mubr.bf16.mxu0 0
      %1899 = vmatmul.mubr.bf16.gmra.mrb[0].mxu0 %v1758
      %v1900 = vpop.f32.mrb[0].mxu0
      %v1901 = vadd.f32 %v1487, %v1900
      %v1902 = vpop.f32.mrb[0].mxu0
      %v1903 = vadd.f32 %v1487, %v1902
      %v1904 = vpop.f32.mrb[0].mxu0
      %v1905 = vpop.f32.mrb[0].mxu0
      %1906 = vdwg.mxu0
      %1907 = vmatprep.subr.bf16.mxu0 %v1659
      %1908 = vmatpush1.bf16.msra.mxu0 %v1658
      %1909 = vmatprep.subr.bf16.mxu0 %v1667
      %1910 = vmatpush1.bf16.msra.mxu0 %v1666
      %1911 = vmatprep.subr.bf16.mxu0 %v1675
      %1912 = vmatpush1.bf16.msra.mxu0 %v1674
      %1913 = vmatprep.subr.bf16.mxu0 %v1683
      %1914 = vmatpush1.bf16.msra.mxu0 %v1682
      %1915 = vmatprep.subr.bf16.mxu0 %v1691
      %1916 = vmatpush1.bf16.msra.mxu0 %v1690
      %1917 = vmatprep.subr.bf16.mxu0 %v1699
      %1918 = vmatpush1.bf16.msra.mxu0 %v1698
      %1919 = vmatprep.subr.bf16.mxu0 %v1782
      %1920 = vmatpush1.bf16.msra.mxu0 %v1779
      %1921 = vmatprep.subr.bf16.mxu0 0
      %1922 = vmatpush1.bf16.msra.mxu0 0
      %1923 = vmatprep.subr.bf16.mxu0 0
      %1924 = vmatpush1.bf16.msra.mxu0 0
      %1925 = vmatprep.subr.bf16.mxu0 0
      %1926 = vmatpush1.bf16.msra.mxu0 0
      %1927 = vmatprep.subr.bf16.mxu0 0
      %1928 = vmatpush1.bf16.msra.mxu0 0
      %1929 = vmatprep.subr.bf16.mxu0 0
      %1930 = vmatpush1.bf16.msra.mxu0 0
      %1931 = vmatprep.subr.bf16.mxu0 0
      %1932 = vmatpush1.bf16.msra.mxu0 0
      %1933 = vmatprep.subr.bf16.mxu0 0
      %1934 = vmatpush1.bf16.msra.mxu0 0
      %1935 = vmatprep.subr.bf16.mxu0 0
      %1936 = vmatpush1.bf16.msra.mxu0 0
      %1937 = vmatprep.subr.bf16.mxu0 0
      %1938 = vmatpush1.bf16.msra.mxu0 0
      %1939 = vmatprep.mubr.bf16.mxu0 0
      %1940 = vmatmul.mubr.bf16.gmra.mrb[0].mxu0 %v1758
      %v1941 = vpop.f32.mrb[0].mxu0
      %v1942 = vadd.f32 %v1487, %v1941
      %v1943 = vpop.f32.mrb[0].mxu0
      %v1944 = vadd.f32 %v1487, %v1943
      %v1945 = vpop.f32.mrb[0].mxu0
      %v1946 = vpop.f32.mrb[0].mxu0
      %1947 = vdwg.mxu0
      %v1948 = vmax.f32 %v1819, 0.0
      %v1949 = vmax.f32 %v1821, 0.0
      %v1950 = vmax.f32 %v1860, 0.0
      %v1951 = vmax.f32 %v1862, 0.0
      %v1952 = vmax.f32 %v1901, 0.0
      %v1953 = vmax.f32 %v1903, 0.0
      %v1954 = vmax.f32 %v1942, 0.0
      %v1955 = vmax.f32 %v1944, 0.0
      %1956 = vst [vmem:[%s305] sm:$0xff] %v1948
      %1957 = vst [vmem:[%s305 + $0x8] sm:$0xff] %v1949
      %1958 = vst [vmem:[%s305 + $0x10] sm:$0xff] %v1950
      %1959 = vst [vmem:[%s305 + $0x18] sm:$0xff] %v1951
      %1960 = vst [vmem:[%s305 + $0x20] sm:$0xff] %v1952
      %1961 = vst [vmem:[%s305 + $0x28] sm:$0xff] %v1953
      %1962 = vst [vmem:[%s305 + $0x30] sm:$0xff] %v1954
      %1963 = vst [vmem:[%s305 + $0x38] sm:$0xff] %v1955
      %s1964 = smul.u32 8, %s20
      %p1965 = scmp.lt.s32.totalorder %s19, 1
      %s1966 = scalar_select %p1965, %s19, 1
      %p1967 = scmp.lt.s32.totalorder %s1964, 7
      %s1968 = scalar_select %p1967, %s1964, 7
      %s1969 = smul.addr %s1966, 8
      %s1970 = sadd.s32 %s1968, %s1969
      %s1971 = smul.addr %s1970, 8
      %s1972 = scalar_lea.vmem %s4, %s1971
      // Predicated region
      $region37: #{basic_convolution_block.1} parent=35 // pred_check
        %p1973 = pneg %p149
      $region38: #{basic_convolution_block.1} parent=35 // pred_check_branch
        %1975 = sbr.rel (%p1973) target = $region40
      $region39: #{basic_convolution_block.1} parent=35 // pred_region
        %s1976 = smul.u32 8, %s20
      $region40: #{basic_convolution_block.1} parent=35 // pred_fallthru
        _
    $region36: #{basic_convolution_block.1} parent=5 // pred_fallthru
      _
    %p1977 = scmp.le.s32.totalorder 2, %s10
    // Predicated region
    $region41: #{basic_convolution_block.1} parent=5 // pred_check
      %p1978 = pneg %p1977
    $region42: #{basic_convolution_block.1} parent=5 // pred_check_branch
      %1980 = sbr.rel (%p1978) target = $region44
    $region43: #{basic_convolution_block.1} parent=5 // pred_region
      %s1981 = ssub.s32 %s10, 2
      // Predicated region
      $region45: #{basic_convolution_block.1} parent=43 // pred_check
        %p1982 = pneg %p155
      $region46: #{basic_convolution_block.1} parent=43 // pred_check_branch
        %1984 = sbr.rel (%p1982) target = $region48
      $region47: #{basic_convolution_block.1} parent=43 // pred_region
        %s1985 = smul.u32 8, %s22
        %p1986 = scmp.lt.s32.totalorder %s21, 1
        %s1987 = scalar_select %p1986, %s21, 1
        %p1988 = scmp.lt.s32.totalorder %s1985, 7
        %s1989 = scalar_select %p1988, %s1985, 7
        %s1990 = smul.addr %s1987, 8
        %s1991 = sadd.s32 %s1989, %s1990
        %s1992 = smul.addr %s1991, 8
        %s1993 = scalar_lea.vmem %s4, %s1992
      $region48: #{basic_convolution_block.1} parent=43 // pred_fallthru
        _
    $region44: #{basic_convolution_block.1} parent=5 // pred_fallthru
      _
  $region6: #{basic_convolution_block.1} parent=0 // loop_footer
    %s14 = sadd.s32 1, %s10
  $region7: #{basic_convolution_block.1} parent=0 // loop_footer_branch
    %9 = sbr.rel target = $region3
  $region8: #{basic_convolution_block.1} parent=0 // loop_exit
    _

</llo_original>
